<compile_context>
chip_gen: v5e
topology: v5e:2x2
jax: 0.10.0
libtpu: 0.0.40
codegen_flags: <defaults>
</compile_context>

<pallas_src>
import functools
import math

import jax
import jax.numpy as jnp
from jax.experimental import pallas as pl
from jax.experimental.pallas import tpu as pltpu


def aggr_att_rnn_kernel(
    x_ref,       # (bb, T)   batch-major input, f32
    wxf_ref,     # (1, 8H)   fwd input weights in fwd gate cols (pre-scaled), f32
    wxb_ref,     # (1, 8H)   bwd input weights in bwd gate cols (pre-scaled), f32
    bx_ref,      # (1, 8H)   interleaved biases (pre-scaled), f32
    whh_ref,     # (2H, 8H)  block-diagonal recurrence weight (pre-scaled), bf16
    h0_ref,      # (bb, 2H)  initial hidden  [h0_f | h0_b], f32
    c0_ref,      # (bb, 2H)  initial cell    [c0_f | c0_b], f32
    wfch_ref,    # (2H, CP)  fc1 weight rows for h_fin, class-padded, bf16
    wfcc_ref,    # (2H, CP)  fc1 weight rows for context, class-padded, bf16
    bfc_ref,     # (1, CP)   fc1 bias, class-padded, f32
    logits_ref,  # out (bb, CP) f32
    probs_ref,   # out (bb, CP) f32
    hs_ref,      # scratch VMEM (T, bb, 2H) f32 — per-step fused hidden states
    *,
    num_classes,
):
    bb, T = x_ref.shape
    H2 = h0_ref.shape[1]          # 2H (fused bidirectional state width)
    H = H2 // 2
    CP = logits_ref.shape[1]

    x = x_ref[...]                # (bb, T)
    wxf = wxf_ref[...]
    wxb = wxb_ref[...]
    bx = bx_ref[...]

    h = h0_ref[...]               # (bb, 2H) f32 = [h_f, h_b]
    c = c0_ref[...]               # (bb, 2H) f32 = [c_f, c_b]

    # ---- fused bidirectional recurrence (unrolled; T is small & static) ----
    # gate column layout: [ i(2H) | f(2H) | g(2H) | o(2H) ], each [fwd|bwd].
    # i/f/o columns of whh/wx/bias were pre-scaled by 0.5 in the wrapper, so a
    # single tanh yields sigmoid via 0.5*(tanh(z/2)+1).
    for t in range(T):
        pre = jnp.dot(h.astype(jnp.bfloat16), whh_ref[...],
                      preferred_element_type=jnp.float32)            # (bb, 8H)
        gates = (pre
                 + x[:, t:t + 1] * wxf            # fwd input, lane-broadcast
                 + x[:, T - 1 - t:T - t] * wxb    # bwd input (reversed time)
                 + bx)
        tg = jnp.tanh(gates)                      # ONE full-width EUP op
        t_i = tg[:, 0 * H2:1 * H2]
        t_f = tg[:, 1 * H2:2 * H2]
        g_g = tg[:, 2 * H2:3 * H2]
        t_o = tg[:, 3 * H2:4 * H2]
        i_g = 0.5 * (t_i + 1.0)
        f_g = 0.5 * (t_f + 1.0)
        o_g = 0.5 * (t_o + 1.0)
        c = f_g * c + i_g * g_g
        h = o_g * jnp.tanh(c)
        hs_ref[t] = h                             # spill to scratch, not vregs

    # Final bidirectional hidden state: fwd at t=T-1, bwd at original t=0.
    h_fin = h                                                   # (bb, 2H)

    # ---- scaled dot-product attention, all math at full 2H width ----------
    lane_h = jax.lax.broadcasted_iota(jnp.int32, (1, H2), 1)
    fwd_mask = lane_h < H                                        # (1, 2H)
    q_f = jnp.where(fwd_mask, h_fin, 0.0)                        # [h_f | 0 ]
    q_b = jnp.where(fwd_mask, 0.0, h_fin)                        # [ 0 | h_b]

    inv_sqrt = 1.0 / math.sqrt(float(H2))
    lane_t = jax.lax.broadcasted_iota(jnp.int32, (1, T), 1)
    energy = jnp.zeros((bb, T), jnp.float32)
    for t in range(T):
        # rnn_out at original time t = [hs[t][:, :H], hs[T-1-t][:, H:]]
        e_t = jnp.sum(hs_ref[t] * q_f + hs_ref[T - 1 - t] * q_b,
                      axis=1, keepdims=True) * inv_sqrt          # (bb, 1)
        energy = energy + jnp.where(lane_t == t, e_t, 0.0)

    m = jnp.max(energy, axis=1, keepdims=True)
    ew = jnp.exp(energy - m)
    att = ew * pl.reciprocal(jnp.sum(ew, axis=1, keepdims=True), approx=True)

    ctx = jnp.zeros((bb, H2), jnp.float32)                       # [ctx_f|ctx_b]
    for t in range(T):
        # first H lanes weighted by att[t], last H lanes by att[T-1-t]
        w_t = jnp.where(fwd_mask, att[:, t:t + 1], att[:, T - 1 - t:T - t])
        ctx = ctx + w_t * hs_ref[t]

    # ---- fc1 on concat([h_fin, ctx]) as two bf16 dots (class-padded N) ----
    logits = (jnp.dot(h_fin.astype(jnp.bfloat16), wfch_ref[...],
                      preferred_element_type=jnp.float32)
              + jnp.dot(ctx.astype(jnp.bfloat16), wfcc_ref[...],
                        preferred_element_type=jnp.float32)
              + bfc_ref[...])                                    # (bb, CP)

    # softmax over the real classes only (padded lanes masked out)
    lane_c = jax.lax.broadcasted_iota(jnp.int32, (1, CP), 1)
    cmask = lane_c < num_classes
    z = jnp.where(cmask, logits, -1e30)
    lm = jnp.max(z, axis=1, keepdims=True)
    pe = jnp.exp(z - lm)
    probs = pe * pl.reciprocal(jnp.sum(pe, axis=1, keepdims=True), approx=True)

    logits_ref[...] = logits
    probs_ref[...] = probs


def aggr_att_rnn_forward(feaseq, params, *, batch_block=None):
    """Parameter layout prep in plain JAX; all compute in the Pallas kernel."""
    x = feaseq.astype(jnp.float32)                       # (B, T) batch-major
    B, T = x.shape
    H = params["w_hh_f"].shape[1]
    C = params["w_fc"].shape[0]
    H2, G = 2 * H, 8 * H

    if H2 > 128:
        # TODO(synk): for 2H > MXU-K (128 on v5e) the block-diagonal fused whh
        # wastes MXU MACs/bytes — switch to two dense per-direction dots/step.
        raise NotImplementedError("fused bidirectional path requires 2*hidden_size <= 128")

    CP = max(128, -(-C // 128) * 128)                    # lane-dense output width

    def interleave(f_part, b_part):
        # (..., 4H) x (..., 4H) -> (..., 8H) with per-gate column blocks [fwd|bwd].
        f4 = f_part.reshape(f_part.shape[:-1] + (4, H))
        b4 = b_part.reshape(b_part.shape[:-1] + (4, H))
        return jnp.concatenate([f4, b4], axis=-1).reshape(f_part.shape[:-1] + (G,))

    zH4 = jnp.zeros((H, 4 * H), jnp.float32)
    z14 = jnp.zeros((1, 4 * H), jnp.float32)

    # Block-diagonal fused recurrence weight: rows [h_f | h_b] -> interleaved gates.
    whh = jnp.concatenate([interleave(params["w_hh_f"].T, zH4),
                           interleave(zH4, params["w_hh_b"].T)], axis=0)   # (2H, 8H)
    wxf = interleave(params["w_ih_f"].T, z14)                              # (1, 8H)
    wxb = interleave(z14, params["w_ih_b"].T)                              # (1, 8H)
    bx = interleave((params["b_ih_f"] + params["b_hh_f"])[None, :],
                    (params["b_ih_b"] + params["b_hh_b"])[None, :])        # (1, 8H)

    # Fold the sigmoid half-scale into i/f/o gate columns -> single tanh in-kernel.
    gate_scale = jnp.concatenate([jnp.full((1, H2), 0.5, jnp.float32),
                                  jnp.full((1, H2), 0.5, jnp.float32),
                                  jnp.ones((1, H2), jnp.float32),
                                  jnp.full((1, H2), 0.5, jnp.float32)], axis=1)
    whh = (whh * gate_scale).astype(jnp.bfloat16)        # bf16 for the MXU dot
    wxf = wxf * gate_scale
    wxb = wxb * gate_scale
    bx = bx * gate_scale

    h0 = jnp.concatenate([params["h0"][0], params["h0"][1]], axis=1)       # (B, 2H)
    c0 = jnp.concatenate([params["c0"][0], params["c0"][1]], axis=1)       # (B, 2H)

    # fc1 weights split by feature block and zero-padded to CP class columns.
    wfc_t = params["w_fc"].T                                               # (4H, C)
    wfc_h = jnp.zeros((H2, CP), jnp.float32).at[:, :C].set(wfc_t[:H2]).astype(jnp.bfloat16)
    wfc_c = jnp.zeros((H2, CP), jnp.float32).at[:, :C].set(wfc_t[H2:]).astype(jnp.bfloat16)
    bfc = jnp.zeros((1, CP), jnp.float32).at[:, :C].set(params["b_fc"][None, :])

    # Batch-parallel grid: bb=128 keeps the per-step live set bounded and gives
    # grid >= 2 for B >= 256 so both v7x TensorCores run; per-block VMEM is far
    # under the v5e 16 MiB scoped default.
    if batch_block is None:
        batch_block = 128 if (B % 128 == 0) else B
    bb = batch_block
    assert B % bb == 0
    grid = (B // bb,)

    def full(shape):
        return pl.BlockSpec(shape, lambda i, _n=len(shape): (0,) * _n)

    def batched(shape):
        return pl.BlockSpec(shape, lambda i: (i, 0))

    kernel = functools.partial(aggr_att_rnn_kernel, num_classes=C)

    logits_p, probs_p = pl.pallas_call(
        kernel,
        grid=grid,
        out_shape=(jax.ShapeDtypeStruct((B, CP), jnp.float32),
                   jax.ShapeDtypeStruct((B, CP), jnp.float32)),
        in_specs=[
            batched((bb, T)),        # x (batch-major; bwd direction indexes T-1-t)
            full((1, G)),            # wxf
            full((1, G)),            # wxb
            full((1, G)),            # bx
            full((H2, G)),           # whh (bf16)
            batched((bb, H2)),       # h0
            batched((bb, H2)),       # c0
            full((H2, CP)),          # wfc_h (bf16)
            full((H2, CP)),          # wfc_c (bf16)
            full((1, CP)),           # bfc
        ],
        out_specs=(batched((bb, CP)), batched((bb, CP))),
        scratch_shapes=[pltpu.VMEM((T, bb, H2), jnp.float32)],
        compiler_params=pltpu.CompilerParams(dimension_semantics=("parallel",)),
    )(x, wxf, wxb, bx, whh, h0, c0, wfc_h, wfc_c, bfc)

    return logits_p[:, :C], probs_p[:, :C]


def make_params(key, batch_size, hidden_size, num_classes):
    H = hidden_size
    ks = jax.random.split(key, 12)

    def init(k, shape, scale=0.1):
        return (scale * jax.random.normal(k, shape)).astype(jnp.float32)

    return dict(
        # bidirectional, num_layers = 1; LSTM input_size = 1 (see header note)
        w_ih_f=init(ks[0], (4 * H, 1)),
        w_hh_f=init(ks[1], (4 * H, H)),
        b_ih_f=init(ks[2], (4 * H,)),
        b_hh_f=init(ks[3], (4 * H,)),
        w_ih_b=init(ks[4], (4 * H, 1)),
        w_hh_b=init(ks[5], (4 * H, H)),
        b_ih_b=init(ks[6], (4 * H,)),
        b_hh_b=init(ks[7], (4 * H,)),
        # fc1: Linear(hidden_size * 2 * 2, num_classes)
        w_fc=init(ks[8], (num_classes, 4 * H)),
        b_fc=init(ks[9], (num_classes,)),
        # init_hidden(): torch.randn(num_layers * 2, B, H) — fixed here
        h0=jax.random.normal(ks[10], (2, batch_size, H), dtype=jnp.float32),
        c0=jax.random.normal(ks[11], (2, batch_size, H), dtype=jnp.float32),
    )


def reference_forward(feaseq, params):
    """Pure-JAX f32 reference with identical math for correctness checking."""
    x = feaseq.astype(jnp.float32)[..., None]            # (B, T, 1)
    H = params["w_hh_f"].shape[1]

    def run_dir(w_ih, w_hh, b_ih, b_hh, h0, c0, reverse):
        def step(carry, x_t):
            h, c = carry
            gates = x_t @ w_ih.T + h @ w_hh.T + b_ih + b_hh
            i = jax.nn.sigmoid(gates[:, :H])
            f = jax.nn.sigmoid(gates[:, H:2 * H])
            g = jnp.tanh(gates[:, 2 * H:3 * H])
            o = jax.nn.sigmoid(gates[:, 3 * H:])
            c = f * c + i * g
            h = o * jnp.tanh(c)
            return (h, c), h
        xs = jnp.swapaxes(x, 0, 1)                       # (T, B, 1)
        (hT, _), hs = jax.lax.scan(step, (h0, c0), xs, reverse=reverse)
        return hT, hs                                    # hs: (T, B, H)

    h_f, out_f = run_dir(params["w_ih_f"], params["w_hh_f"], params["b_ih_f"],
                         params["b_hh_f"], params["h0"][0], params["c0"][0], False)
    h_b, out_b = run_dir(params["w_ih_b"], params["w_hh_b"], params["b_ih_b"],
                         params["b_hh_b"], params["h0"][1], params["c0"][1], True)

    rnn_out = jnp.swapaxes(jnp.concatenate([out_f, out_b], axis=-1), 0, 1)  # (B, T, 2H)
    h_n = jnp.concatenate([h_f, h_b], axis=-1)                              # (B, 2H)
    scale = 1.0 / math.sqrt(2.0 * H)
    energy = jnp.einsum("bd,btd->bt", h_n, rnn_out) * scale
    att = jax.nn.softmax(energy, axis=1)
    ctx = jnp.einsum("bt,btd->bd", att, rnn_out)
    feat = jnp.concatenate([h_n, ctx], axis=-1)                             # (B, 4H)
    logits = feat @ params["w_fc"].T + params["b_fc"]
    return logits, jax.nn.softmax(logits, axis=1)


if __name__ == "__main__":
    B, T, H, C = 8, 8, 32, 2          # batch, seq_len, hidden_size, num_classes
    key = jax.random.PRNGKey(0)
    k_x, k_p = jax.random.split(key)

    feaseq = jax.random.normal(k_x, (B, T), dtype=jnp.float32)
    params = make_params(k_p, B, H, C)

    logits, probs = jax.jit(aggr_att_rnn_forward)(feaseq, params)
    logits, probs = jax.block_until_ready((logits, probs))

    ref_logits, ref_probs = reference_forward(feaseq, params)
    # bf16 MXU dots (f32 accumulation) + approx reciprocals -> relaxed tolerance.
    assert jnp.allclose(logits, ref_logits, atol=3e-2, rtol=3e-2), \
        float(jnp.max(jnp.abs(logits - ref_logits)))
    assert jnp.allclose(probs, ref_probs, atol=3e-2, rtol=3e-2), \
        float(jnp.max(jnp.abs(probs - ref_probs)))
    assert probs.shape == (B, C)

    print("KERNEL_OK")
</pallas_src>

<mosaic_0001>
module attributes {stable_mosaic.version = 11 : i64} {
  func.func @aggr_att_rnn_kernel(%arg0: i32, %arg1: memref<8x8xf32, #tpu.memory_space<vmem>>, %arg2: memref<1x256xf32, #tpu.memory_space<vmem>>, %arg3: memref<1x256xf32, #tpu.memory_space<vmem>>, %arg4: memref<1x256xf32, #tpu.memory_space<vmem>>, %arg5: memref<64x256xbf16, #tpu.memory_space<vmem>>, %arg6: memref<8x64xf32, #tpu.memory_space<vmem>>, %arg7: memref<8x64xf32, #tpu.memory_space<vmem>>, %arg8: memref<64x128xbf16, #tpu.memory_space<vmem>>, %arg9: memref<64x128xbf16, #tpu.memory_space<vmem>>, %arg10: memref<1x128xf32, #tpu.memory_space<vmem>>, %arg11: memref<8x128xf32, #tpu.memory_space<vmem>>, %arg12: memref<8x128xf32, #tpu.memory_space<vmem>>, %arg13: memref<8x8x64xf32, #tpu.memory_space<vmem>>) attributes {dimension_semantics = [#tpu.dimension_semantics<parallel>], iteration_bounds = array<i64: 1>, scalar_prefetch = 0 : i64, scratch_operands = 1 : i64, tpu.core_type = #tpu.core_type<tc>, window_params = [{transform_indices = @transform_0, window_bounds = array<i64: 8, 8>}, {pipeline_mode = #tpu.pipeline_mode<synchronous>, transform_indices = @transform_1, window_bounds = array<i64: 1, 256>}, {pipeline_mode = #tpu.pipeline_mode<synchronous>, transform_indices = @transform_2, window_bounds = array<i64: 1, 256>}, {pipeline_mode = #tpu.pipeline_mode<synchronous>, transform_indices = @transform_3, window_bounds = array<i64: 1, 256>}, {pipeline_mode = #tpu.pipeline_mode<synchronous>, transform_indices = @transform_4, window_bounds = array<i64: 64, 256>}, {transform_indices = @transform_5, window_bounds = array<i64: 8, 64>}, {transform_indices = @transform_6, window_bounds = array<i64: 8, 64>}, {pipeline_mode = #tpu.pipeline_mode<synchronous>, transform_indices = @transform_7, window_bounds = array<i64: 64, 128>}, {pipeline_mode = #tpu.pipeline_mode<synchronous>, transform_indices = @transform_8, window_bounds = array<i64: 64, 128>}, {pipeline_mode = #tpu.pipeline_mode<synchronous>, transform_indices = @transform_9, window_bounds = array<i64: 1, 128>}, {transform_indices = @transform_10, window_bounds = array<i64: 8, 128>}, {transform_indices = @transform_11, window_bounds = array<i64: 8, 128>}]} {
    %c0 = arith.constant 0 : index
    %c0_0 = arith.constant 0 : index
    %0 = vector.load %arg1[%c0, %c0_0] : memref<8x8xf32, #tpu.memory_space<vmem>>, vector<8x8xf32>
    %c0_1 = arith.constant 0 : index
    %c0_2 = arith.constant 0 : index
    %1 = vector.load %arg2[%c0_1, %c0_2] : memref<1x256xf32, #tpu.memory_space<vmem>>, vector<1x256xf32>
    %c0_3 = arith.constant 0 : index
    %c0_4 = arith.constant 0 : index
    %2 = vector.load %arg3[%c0_3, %c0_4] : memref<1x256xf32, #tpu.memory_space<vmem>>, vector<1x256xf32>
    %c0_5 = arith.constant 0 : index
    %c0_6 = arith.constant 0 : index
    %3 = vector.load %arg4[%c0_5, %c0_6] : memref<1x256xf32, #tpu.memory_space<vmem>>, vector<1x256xf32>
    %c0_7 = arith.constant 0 : index
    %c0_8 = arith.constant 0 : index
    %4 = vector.load %arg6[%c0_7, %c0_8] : memref<8x64xf32, #tpu.memory_space<vmem>>, vector<8x64xf32>
    %c0_9 = arith.constant 0 : index
    %c0_10 = arith.constant 0 : index
    %5 = vector.load %arg7[%c0_9, %c0_10] : memref<8x64xf32, #tpu.memory_space<vmem>>, vector<8x64xf32>
    %6 = arith.truncf %4 : vector<8x64xf32> to vector<8x64xbf16>
    %c0_11 = arith.constant 0 : index
    %c0_12 = arith.constant 0 : index
    %7 = vector.load %arg5[%c0_11, %c0_12] : memref<64x256xbf16, #tpu.memory_space<vmem>>, vector<64x256xbf16>
    %cst = arith.constant dense<0.000000e+00> : vector<8x256xf32>
    %8 = tpu.matmul %6, %7, %cst {dimension_numbers = #tpu.dot_dimension_numbers<[1], [0], [0], [1], [0, 0, 1, 1], [], []>} : vector<8x64xbf16>, vector<64x256xbf16>, vector<8x256xf32> -> vector<8x256xf32>
    %9 = vector.extract_strided_slice %0 {offsets = [0, 0], sizes = [8, 1], strides = [1, 1]} : vector<8x8xf32> to vector<8x1xf32>
    %10 = vector.broadcast %9 : vector<8x1xf32> to vector<8x256xf32>
    %11 = vector.broadcast %1 : vector<1x256xf32> to vector<8x256xf32>
    %12 = arith.mulf %10, %11 : vector<8x256xf32>
    %13 = arith.addf %8, %12 : vector<8x256xf32>
    %14 = vector.extract_strided_slice %0 {offsets = [0, 7], sizes = [8, 1], strides = [1, 1]} : vector<8x8xf32> to vector<8x1xf32>
    %15 = vector.broadcast %14 : vector<8x1xf32> to vector<8x256xf32>
    %16 = vector.broadcast %2 : vector<1x256xf32> to vector<8x256xf32>
    %17 = arith.mulf %15, %16 : vector<8x256xf32>
    %18 = arith.addf %13, %17 : vector<8x256xf32>
    %19 = vector.broadcast %3 : vector<1x256xf32> to vector<8x256xf32>
    %20 = arith.addf %18, %19 : vector<8x256xf32>
    %21 = math.tanh %20 : vector<8x256xf32>
    %22 = vector.extract_strided_slice %21 {offsets = [0, 0], sizes = [8, 64], strides = [1, 1]} : vector<8x256xf32> to vector<8x64xf32>
    %23 = vector.extract_strided_slice %21 {offsets = [0, 64], sizes = [8, 64], strides = [1, 1]} : vector<8x256xf32> to vector<8x64xf32>
    %24 = vector.extract_strided_slice %21 {offsets = [0, 128], sizes = [8, 64], strides = [1, 1]} : vector<8x256xf32> to vector<8x64xf32>
    %25 = vector.extract_strided_slice %21 {offsets = [0, 192], sizes = [8, 64], strides = [1, 1]} : vector<8x256xf32> to vector<8x64xf32>
    %cst_13 = arith.constant 1.000000e+00 : f32
    %26 = vector.broadcast %cst_13 : f32 to vector<8x64xf32>
    %27 = arith.addf %22, %26 : vector<8x64xf32>
    %cst_14 = arith.constant 5.000000e-01 : f32
    %28 = vector.broadcast %cst_14 : f32 to vector<8x64xf32>
    %29 = arith.mulf %28, %27 : vector<8x64xf32>
    %cst_15 = arith.constant 1.000000e+00 : f32
    %30 = vector.broadcast %cst_15 : f32 to vector<8x64xf32>
    %31 = arith.addf %23, %30 : vector<8x64xf32>
    %cst_16 = arith.constant 5.000000e-01 : f32
    %32 = vector.broadcast %cst_16 : f32 to vector<8x64xf32>
    %33 = arith.mulf %32, %31 : vector<8x64xf32>
    %cst_17 = arith.constant 1.000000e+00 : f32
    %34 = vector.broadcast %cst_17 : f32 to vector<8x64xf32>
    %35 = arith.addf %25, %34 : vector<8x64xf32>
    %cst_18 = arith.constant 5.000000e-01 : f32
    %36 = vector.broadcast %cst_18 : f32 to vector<8x64xf32>
    %37 = arith.mulf %36, %35 : vector<8x64xf32>
    %38 = arith.mulf %33, %5 : vector<8x64xf32>
    %39 = arith.mulf %29, %24 : vector<8x64xf32>
    %40 = arith.addf %38, %39 : vector<8x64xf32>
    %41 = math.tanh %40 : vector<8x64xf32>
    %42 = arith.mulf %37, %41 : vector<8x64xf32>
    %c0_19 = arith.constant 0 : index
    %c0_20 = arith.constant 0 : index
    %c0_21 = arith.constant 0 : index
    %43 = vector.load %arg13[%c0_19, %c0_20, %c0_21] : memref<8x8x64xf32, #tpu.memory_space<vmem>>, vector<1x8x64xf32>
    %44 = vector.shape_cast %43 : vector<1x8x64xf32> to vector<8x64xf32>
    %45 = vector.shape_cast %42 : vector<8x64xf32> to vector<1x8x64xf32>
    tpu.vector_store %arg13[%c0_19, %c0_20, %c0_21], %45 {strides = array<i32>} : memref<8x8x64xf32, #tpu.memory_space<vmem>>, vector<1x8x64xf32>,
    %46 = arith.truncf %42 : vector<8x64xf32> to vector<8x64xbf16>
    %c0_22 = arith.constant 0 : index
    %c0_23 = arith.constant 0 : index
    %47 = vector.load %arg5[%c0_22, %c0_23] : memref<64x256xbf16, #tpu.memory_space<vmem>>, vector<64x256xbf16>
    %cst_24 = arith.constant dense<0.000000e+00> : vector<8x256xf32>
    %48 = tpu.matmul %46, %47, %cst_24 {dimension_numbers = #tpu.dot_dimension_numbers<[1], [0], [0], [1], [0, 0, 1, 1], [], []>} : vector<8x64xbf16>, vector<64x256xbf16>, vector<8x256xf32> -> vector<8x256xf32>
    %49 = vector.extract_strided_slice %0 {offsets = [0, 1], sizes = [8, 1], strides = [1, 1]} : vector<8x8xf32> to vector<8x1xf32>
    %50 = vector.broadcast %49 : vector<8x1xf32> to vector<8x256xf32>
    %51 = vector.broadcast %1 : vector<1x256xf32> to vector<8x256xf32>
    %52 = arith.mulf %50, %51 : vector<8x256xf32>
    %53 = arith.addf %48, %52 : vector<8x256xf32>
    %54 = vector.extract_strided_slice %0 {offsets = [0, 6], sizes = [8, 1], strides = [1, 1]} : vector<8x8xf32> to vector<8x1xf32>
    %55 = vector.broadcast %54 : vector<8x1xf32> to vector<8x256xf32>
    %56 = vector.broadcast %2 : vector<1x256xf32> to vector<8x256xf32>
    %57 = arith.mulf %55, %56 : vector<8x256xf32>
    %58 = arith.addf %53, %57 : vector<8x256xf32>
    %59 = vector.broadcast %3 : vector<1x256xf32> to vector<8x256xf32>
    %60 = arith.addf %58, %59 : vector<8x256xf32>
    %61 = math.tanh %60 : vector<8x256xf32>
    %62 = vector.extract_strided_slice %61 {offsets = [0, 0], sizes = [8, 64], strides = [1, 1]} : vector<8x256xf32> to vector<8x64xf32>
    %63 = vector.extract_strided_slice %61 {offsets = [0, 64], sizes = [8, 64], strides = [1, 1]} : vector<8x256xf32> to vector<8x64xf32>
    %64 = vector.extract_strided_slice %61 {offsets = [0, 128], sizes = [8, 64], strides = [1, 1]} : vector<8x256xf32> to vector<8x64xf32>
    %65 = vector.extract_strided_slice %61 {offsets = [0, 192], sizes = [8, 64], strides = [1, 1]} : vector<8x256xf32> to vector<8x64xf32>
    %cst_25 = arith.constant 1.000000e+00 : f32
    %66 = vector.broadcast %cst_25 : f32 to vector<8x64xf32>
    %67 = arith.addf %62, %66 : vector<8x64xf32>
    %cst_26 = arith.constant 5.000000e-01 : f32
    %68 = vector.broadcast %cst_26 : f32 to vector<8x64xf32>
    %69 = arith.mulf %68, %67 : vector<8x64xf32>
    %cst_27 = arith.constant 1.000000e+00 : f32
    %70 = vector.broadcast %cst_27 : f32 to vector<8x64xf32>
    %71 = arith.addf %63, %70 : vector<8x64xf32>
    %cst_28 = arith.constant 5.000000e-01 : f32
    %72 = vector.broadcast %cst_28 : f32 to vector<8x64xf32>
    %73 = arith.mulf %72, %71 : vector<8x64xf32>
    %cst_29 = arith.constant 1.000000e+00 : f32
    %74 = vector.broadcast %cst_29 : f32 to vector<8x64xf32>
    %75 = arith.addf %65, %74 : vector<8x64xf32>
    %cst_30 = arith.constant 5.000000e-01 : f32
    %76 = vector.broadcast %cst_30 : f32 to vector<8x64xf32>
    %77 = arith.mulf %76, %75 : vector<8x64xf32>
    %78 = arith.mulf %73, %40 : vector<8x64xf32>
    %79 = arith.mulf %69, %64 : vector<8x64xf32>
    %80 = arith.addf %78, %79 : vector<8x64xf32>
    %81 = math.tanh %80 : vector<8x64xf32>
    %82 = arith.mulf %77, %81 : vector<8x64xf32>
    %c1 = arith.constant 1 : index
    %c0_31 = arith.constant 0 : index
    %c0_32 = arith.constant 0 : index
    %83 = vector.load %arg13[%c1, %c0_31, %c0_32] : memref<8x8x64xf32, #tpu.memory_space<vmem>>, vector<1x8x64xf32>
    %84 = vector.shape_cast %83 : vector<1x8x64xf32> to vector<8x64xf32>
    %85 = vector.shape_cast %82 : vector<8x64xf32> to vector<1x8x64xf32>
    tpu.vector_store %arg13[%c1, %c0_31, %c0_32], %85 {strides = array<i32>} : memref<8x8x64xf32, #tpu.memory_space<vmem>>, vector<1x8x64xf32>,
    %86 = arith.truncf %82 : vector<8x64xf32> to vector<8x64xbf16>
    %c0_33 = arith.constant 0 : index
    %c0_34 = arith.constant 0 : index
    %87 = vector.load %arg5[%c0_33, %c0_34] : memref<64x256xbf16, #tpu.memory_space<vmem>>, vector<64x256xbf16>
    %cst_35 = arith.constant dense<0.000000e+00> : vector<8x256xf32>
    %88 = tpu.matmul %86, %87, %cst_35 {dimension_numbers = #tpu.dot_dimension_numbers<[1], [0], [0], [1], [0, 0, 1, 1], [], []>} : vector<8x64xbf16>, vector<64x256xbf16>, vector<8x256xf32> -> vector<8x256xf32>
    %89 = vector.extract_strided_slice %0 {offsets = [0, 2], sizes = [8, 1], strides = [1, 1]} : vector<8x8xf32> to vector<8x1xf32>
    %90 = vector.broadcast %89 : vector<8x1xf32> to vector<8x256xf32>
    %91 = vector.broadcast %1 : vector<1x256xf32> to vector<8x256xf32>
    %92 = arith.mulf %90, %91 : vector<8x256xf32>
    %93 = arith.addf %88, %92 : vector<8x256xf32>
    %94 = vector.extract_strided_slice %0 {offsets = [0, 5], sizes = [8, 1], strides = [1, 1]} : vector<8x8xf32> to vector<8x1xf32>
    %95 = vector.broadcast %94 : vector<8x1xf32> to vector<8x256xf32>
    %96 = vector.broadcast %2 : vector<1x256xf32> to vector<8x256xf32>
    %97 = arith.mulf %95, %96 : vector<8x256xf32>
    %98 = arith.addf %93, %97 : vector<8x256xf32>
    %99 = vector.broadcast %3 : vector<1x256xf32> to vector<8x256xf32>
    %100 = arith.addf %98, %99 : vector<8x256xf32>
    %101 = math.tanh %100 : vector<8x256xf32>
    %102 = vector.extract_strided_slice %101 {offsets = [0, 0], sizes = [8, 64], strides = [1, 1]} : vector<8x256xf32> to vector<8x64xf32>
    %103 = vector.extract_strided_slice %101 {offsets = [0, 64], sizes = [8, 64], strides = [1, 1]} : vector<8x256xf32> to vector<8x64xf32>
    %104 = vector.extract_strided_slice %101 {offsets = [0, 128], sizes = [8, 64], strides = [1, 1]} : vector<8x256xf32> to vector<8x64xf32>
    %105 = vector.extract_strided_slice %101 {offsets = [0, 192], sizes = [8, 64], strides = [1, 1]} : vector<8x256xf32> to vector<8x64xf32>
    %cst_36 = arith.constant 1.000000e+00 : f32
    %106 = vector.broadcast %cst_36 : f32 to vector<8x64xf32>
    %107 = arith.addf %102, %106 : vector<8x64xf32>
    %cst_37 = arith.constant 5.000000e-01 : f32
    %108 = vector.broadcast %cst_37 : f32 to vector<8x64xf32>
    %109 = arith.mulf %108, %107 : vector<8x64xf32>
    %cst_38 = arith.constant 1.000000e+00 : f32
    %110 = vector.broadcast %cst_38 : f32 to vector<8x64xf32>
    %111 = arith.addf %103, %110 : vector<8x64xf32>
    %cst_39 = arith.constant 5.000000e-01 : f32
    %112 = vector.broadcast %cst_39 : f32 to vector<8x64xf32>
    %113 = arith.mulf %112, %111 : vector<8x64xf32>
    %cst_40 = arith.constant 1.000000e+00 : f32
    %114 = vector.broadcast %cst_40 : f32 to vector<8x64xf32>
    %115 = arith.addf %105, %114 : vector<8x64xf32>
    %cst_41 = arith.constant 5.000000e-01 : f32
    %116 = vector.broadcast %cst_41 : f32 to vector<8x64xf32>
    %117 = arith.mulf %116, %115 : vector<8x64xf32>
    %118 = arith.mulf %113, %80 : vector<8x64xf32>
    %119 = arith.mulf %109, %104 : vector<8x64xf32>
    %120 = arith.addf %118, %119 : vector<8x64xf32>
    %121 = math.tanh %120 : vector<8x64xf32>
    %122 = arith.mulf %117, %121 : vector<8x64xf32>
    %c2 = arith.constant 2 : index
    %c0_42 = arith.constant 0 : index
    %c0_43 = arith.constant 0 : index
    %123 = vector.load %arg13[%c2, %c0_42, %c0_43] : memref<8x8x64xf32, #tpu.memory_space<vmem>>, vector<1x8x64xf32>
    %124 = vector.shape_cast %123 : vector<1x8x64xf32> to vector<8x64xf32>
    %125 = vector.shape_cast %122 : vector<8x64xf32> to vector<1x8x64xf32>
    tpu.vector_store %arg13[%c2, %c0_42, %c0_43], %125 {strides = array<i32>} : memref<8x8x64xf32, #tpu.memory_space<vmem>>, vector<1x8x64xf32>,
    %126 = arith.truncf %122 : vector<8x64xf32> to vector<8x64xbf16>
    %c0_44 = arith.constant 0 : index
    %c0_45 = arith.constant 0 : index
    %127 = vector.load %arg5[%c0_44, %c0_45] : memref<64x256xbf16, #tpu.memory_space<vmem>>, vector<64x256xbf16>
    %cst_46 = arith.constant dense<0.000000e+00> : vector<8x256xf32>
    %128 = tpu.matmul %126, %127, %cst_46 {dimension_numbers = #tpu.dot_dimension_numbers<[1], [0], [0], [1], [0, 0, 1, 1], [], []>} : vector<8x64xbf16>, vector<64x256xbf16>, vector<8x256xf32> -> vector<8x256xf32>
    %129 = vector.extract_strided_slice %0 {offsets = [0, 3], sizes = [8, 1], strides = [1, 1]} : vector<8x8xf32> to vector<8x1xf32>
    %130 = vector.broadcast %129 : vector<8x1xf32> to vector<8x256xf32>
    %131 = vector.broadcast %1 : vector<1x256xf32> to vector<8x256xf32>
    %132 = arith.mulf %130, %131 : vector<8x256xf32>
    %133 = arith.addf %128, %132 : vector<8x256xf32>
    %134 = vector.extract_strided_slice %0 {offsets = [0, 4], sizes = [8, 1], strides = [1, 1]} : vector<8x8xf32> to vector<8x1xf32>
    %135 = vector.broadcast %134 : vector<8x1xf32> to vector<8x256xf32>
    %136 = vector.broadcast %2 : vector<1x256xf32> to vector<8x256xf32>
    %137 = arith.mulf %135, %136 : vector<8x256xf32>
    %138 = arith.addf %133, %137 : vector<8x256xf32>
    %139 = vector.broadcast %3 : vector<1x256xf32> to vector<8x256xf32>
    %140 = arith.addf %138, %139 : vector<8x256xf32>
    %141 = math.tanh %140 : vector<8x256xf32>
    %142 = vector.extract_strided_slice %141 {offsets = [0, 0], sizes = [8, 64], strides = [1, 1]} : vector<8x256xf32> to vector<8x64xf32>
    %143 = vector.extract_strided_slice %141 {offsets = [0, 64], sizes = [8, 64], strides = [1, 1]} : vector<8x256xf32> to vector<8x64xf32>
    %144 = vector.extract_strided_slice %141 {offsets = [0, 128], sizes = [8, 64], strides = [1, 1]} : vector<8x256xf32> to vector<8x64xf32>
    %145 = vector.extract_strided_slice %141 {offsets = [0, 192], sizes = [8, 64], strides = [1, 1]} : vector<8x256xf32> to vector<8x64xf32>
    %cst_47 = arith.constant 1.000000e+00 : f32
    %146 = vector.broadcast %cst_47 : f32 to vector<8x64xf32>
    %147 = arith.addf %142, %146 : vector<8x64xf32>
    %cst_48 = arith.constant 5.000000e-01 : f32
    %148 = vector.broadcast %cst_48 : f32 to vector<8x64xf32>
    %149 = arith.mulf %148, %147 : vector<8x64xf32>
    %cst_49 = arith.constant 1.000000e+00 : f32
    %150 = vector.broadcast %cst_49 : f32 to vector<8x64xf32>
    %151 = arith.addf %143, %150 : vector<8x64xf32>
    %cst_50 = arith.constant 5.000000e-01 : f32
    %152 = vector.broadcast %cst_50 : f32 to vector<8x64xf32>
    %153 = arith.mulf %152, %151 : vector<8x64xf32>
    %cst_51 = arith.constant 1.000000e+00 : f32
    %154 = vector.broadcast %cst_51 : f32 to vector<8x64xf32>
    %155 = arith.addf %145, %154 : vector<8x64xf32>
    %cst_52 = arith.constant 5.000000e-01 : f32
    %156 = vector.broadcast %cst_52 : f32 to vector<8x64xf32>
    %157 = arith.mulf %156, %155 : vector<8x64xf32>
    %158 = arith.mulf %153, %120 : vector<8x64xf32>
    %159 = arith.mulf %149, %144 : vector<8x64xf32>
    %160 = arith.addf %158, %159 : vector<8x64xf32>
    %161 = math.tanh %160 : vector<8x64xf32>
    %162 = arith.mulf %157, %161 : vector<8x64xf32>
    %c3 = arith.constant 3 : index
    %c0_53 = arith.constant 0 : index
    %c0_54 = arith.constant 0 : index
    %163 = vector.load %arg13[%c3, %c0_53, %c0_54] : memref<8x8x64xf32, #tpu.memory_space<vmem>>, vector<1x8x64xf32>
    %164 = vector.shape_cast %163 : vector<1x8x64xf32> to vector<8x64xf32>
    %165 = vector.shape_cast %162 : vector<8x64xf32> to vector<1x8x64xf32>
    tpu.vector_store %arg13[%c3, %c0_53, %c0_54], %165 {strides = array<i32>} : memref<8x8x64xf32, #tpu.memory_space<vmem>>, vector<1x8x64xf32>,
    %166 = arith.truncf %162 : vector<8x64xf32> to vector<8x64xbf16>
    %c0_55 = arith.constant 0 : index
    %c0_56 = arith.constant 0 : index
    %167 = vector.load %arg5[%c0_55, %c0_56] : memref<64x256xbf16, #tpu.memory_space<vmem>>, vector<64x256xbf16>
    %cst_57 = arith.constant dense<0.000000e+00> : vector<8x256xf32>
    %168 = tpu.matmul %166, %167, %cst_57 {dimension_numbers = #tpu.dot_dimension_numbers<[1], [0], [0], [1], [0, 0, 1, 1], [], []>} : vector<8x64xbf16>, vector<64x256xbf16>, vector<8x256xf32> -> vector<8x256xf32>
    %169 = vector.extract_strided_slice %0 {offsets = [0, 4], sizes = [8, 1], strides = [1, 1]} : vector<8x8xf32> to vector<8x1xf32>
    %170 = vector.broadcast %169 : vector<8x1xf32> to vector<8x256xf32>
    %171 = vector.broadcast %1 : vector<1x256xf32> to vector<8x256xf32>
    %172 = arith.mulf %170, %171 : vector<8x256xf32>
    %173 = arith.addf %168, %172 : vector<8x256xf32>
    %174 = vector.extract_strided_slice %0 {offsets = [0, 3], sizes = [8, 1], strides = [1, 1]} : vector<8x8xf32> to vector<8x1xf32>
    %175 = vector.broadcast %174 : vector<8x1xf32> to vector<8x256xf32>
    %176 = vector.broadcast %2 : vector<1x256xf32> to vector<8x256xf32>
    %177 = arith.mulf %175, %176 : vector<8x256xf32>
    %178 = arith.addf %173, %177 : vector<8x256xf32>
    %179 = vector.broadcast %3 : vector<1x256xf32> to vector<8x256xf32>
    %180 = arith.addf %178, %179 : vector<8x256xf32>
    %181 = math.tanh %180 : vector<8x256xf32>
    %182 = vector.extract_strided_slice %181 {offsets = [0, 0], sizes = [8, 64], strides = [1, 1]} : vector<8x256xf32> to vector<8x64xf32>
    %183 = vector.extract_strided_slice %181 {offsets = [0, 64], sizes = [8, 64], strides = [1, 1]} : vector<8x256xf32> to vector<8x64xf32>
    %184 = vector.extract_strided_slice %181 {offsets = [0, 128], sizes = [8, 64], strides = [1, 1]} : vector<8x256xf32> to vector<8x64xf32>
    %185 = vector.extract_strided_slice %181 {offsets = [0, 192], sizes = [8, 64], strides = [1, 1]} : vector<8x256xf32> to vector<8x64xf32>
    %cst_58 = arith.constant 1.000000e+00 : f32
    %186 = vector.broadcast %cst_58 : f32 to vector<8x64xf32>
    %187 = arith.addf %182, %186 : vector<8x64xf32>
    %cst_59 = arith.constant 5.000000e-01 : f32
    %188 = vector.broadcast %cst_59 : f32 to vector<8x64xf32>
    %189 = arith.mulf %188, %187 : vector<8x64xf32>
    %cst_60 = arith.constant 1.000000e+00 : f32
    %190 = vector.broadcast %cst_60 : f32 to vector<8x64xf32>
    %191 = arith.addf %183, %190 : vector<8x64xf32>
    %cst_61 = arith.constant 5.000000e-01 : f32
    %192 = vector.broadcast %cst_61 : f32 to vector<8x64xf32>
    %193 = arith.mulf %192, %191 : vector<8x64xf32>
    %cst_62 = arith.constant 1.000000e+00 : f32
    %194 = vector.broadcast %cst_62 : f32 to vector<8x64xf32>
    %195 = arith.addf %185, %194 : vector<8x64xf32>
    %cst_63 = arith.constant 5.000000e-01 : f32
    %196 = vector.broadcast %cst_63 : f32 to vector<8x64xf32>
    %197 = arith.mulf %196, %195 : vector<8x64xf32>
    %198 = arith.mulf %193, %160 : vector<8x64xf32>
    %199 = arith.mulf %189, %184 : vector<8x64xf32>
    %200 = arith.addf %198, %199 : vector<8x64xf32>
    %201 = math.tanh %200 : vector<8x64xf32>
    %202 = arith.mulf %197, %201 : vector<8x64xf32>
    %c4 = arith.constant 4 : index
    %c0_64 = arith.constant 0 : index
    %c0_65 = arith.constant 0 : index
    %203 = vector.load %arg13[%c4, %c0_64, %c0_65] : memref<8x8x64xf32, #tpu.memory_space<vmem>>, vector<1x8x64xf32>
    %204 = vector.shape_cast %203 : vector<1x8x64xf32> to vector<8x64xf32>
    %205 = vector.shape_cast %202 : vector<8x64xf32> to vector<1x8x64xf32>
    tpu.vector_store %arg13[%c4, %c0_64, %c0_65], %205 {strides = array<i32>} : memref<8x8x64xf32, #tpu.memory_space<vmem>>, vector<1x8x64xf32>,
    %206 = arith.truncf %202 : vector<8x64xf32> to vector<8x64xbf16>
    %c0_66 = arith.constant 0 : index
    %c0_67 = arith.constant 0 : index
    %207 = vector.load %arg5[%c0_66, %c0_67] : memref<64x256xbf16, #tpu.memory_space<vmem>>, vector<64x256xbf16>
    %cst_68 = arith.constant dense<0.000000e+00> : vector<8x256xf32>
    %208 = tpu.matmul %206, %207, %cst_68 {dimension_numbers = #tpu.dot_dimension_numbers<[1], [0], [0], [1], [0, 0, 1, 1], [], []>} : vector<8x64xbf16>, vector<64x256xbf16>, vector<8x256xf32> -> vector<8x256xf32>
    %209 = vector.extract_strided_slice %0 {offsets = [0, 5], sizes = [8, 1], strides = [1, 1]} : vector<8x8xf32> to vector<8x1xf32>
    %210 = vector.broadcast %209 : vector<8x1xf32> to vector<8x256xf32>
    %211 = vector.broadcast %1 : vector<1x256xf32> to vector<8x256xf32>
    %212 = arith.mulf %210, %211 : vector<8x256xf32>
    %213 = arith.addf %208, %212 : vector<8x256xf32>
    %214 = vector.extract_strided_slice %0 {offsets = [0, 2], sizes = [8, 1], strides = [1, 1]} : vector<8x8xf32> to vector<8x1xf32>
    %215 = vector.broadcast %214 : vector<8x1xf32> to vector<8x256xf32>
    %216 = vector.broadcast %2 : vector<1x256xf32> to vector<8x256xf32>
    %217 = arith.mulf %215, %216 : vector<8x256xf32>
    %218 = arith.addf %213, %217 : vector<8x256xf32>
    %219 = vector.broadcast %3 : vector<1x256xf32> to vector<8x256xf32>
    %220 = arith.addf %218, %219 : vector<8x256xf32>
    %221 = math.tanh %220 : vector<8x256xf32>
    %222 = vector.extract_strided_slice %221 {offsets = [0, 0], sizes = [8, 64], strides = [1, 1]} : vector<8x256xf32> to vector<8x64xf32>
    %223 = vector.extract_strided_slice %221 {offsets = [0, 64], sizes = [8, 64], strides = [1, 1]} : vector<8x256xf32> to vector<8x64xf32>
    %224 = vector.extract_strided_slice %221 {offsets = [0, 128], sizes = [8, 64], strides = [1, 1]} : vector<8x256xf32> to vector<8x64xf32>
    %225 = vector.extract_strided_slice %221 {offsets = [0, 192], sizes = [8, 64], strides = [1, 1]} : vector<8x256xf32> to vector<8x64xf32>
    %cst_69 = arith.constant 1.000000e+00 : f32
    %226 = vector.broadcast %cst_69 : f32 to vector<8x64xf32>
    %227 = arith.addf %222, %226 : vector<8x64xf32>
    %cst_70 = arith.constant 5.000000e-01 : f32
    %228 = vector.broadcast %cst_70 : f32 to vector<8x64xf32>
    %229 = arith.mulf %228, %227 : vector<8x64xf32>
    %cst_71 = arith.constant 1.000000e+00 : f32
    %230 = vector.broadcast %cst_71 : f32 to vector<8x64xf32>
    %231 = arith.addf %223, %230 : vector<8x64xf32>
    %cst_72 = arith.constant 5.000000e-01 : f32
    %232 = vector.broadcast %cst_72 : f32 to vector<8x64xf32>
    %233 = arith.mulf %232, %231 : vector<8x64xf32>
    %cst_73 = arith.constant 1.000000e+00 : f32
    %234 = vector.broadcast %cst_73 : f32 to vector<8x64xf32>
    %235 = arith.addf %225, %234 : vector<8x64xf32>
    %cst_74 = arith.constant 5.000000e-01 : f32
    %236 = vector.broadcast %cst_74 : f32 to vector<8x64xf32>
    %237 = arith.mulf %236, %235 : vector<8x64xf32>
    %238 = arith.mulf %233, %200 : vector<8x64xf32>
    %239 = arith.mulf %229, %224 : vector<8x64xf32>
    %240 = arith.addf %238, %239 : vector<8x64xf32>
    %241 = math.tanh %240 : vector<8x64xf32>
    %242 = arith.mulf %237, %241 : vector<8x64xf32>
    %c5 = arith.constant 5 : index
    %c0_75 = arith.constant 0 : index
    %c0_76 = arith.constant 0 : index
    %243 = vector.load %arg13[%c5, %c0_75, %c0_76] : memref<8x8x64xf32, #tpu.memory_space<vmem>>, vector<1x8x64xf32>
    %244 = vector.shape_cast %243 : vector<1x8x64xf32> to vector<8x64xf32>
    %245 = vector.shape_cast %242 : vector<8x64xf32> to vector<1x8x64xf32>
    tpu.vector_store %arg13[%c5, %c0_75, %c0_76], %245 {strides = array<i32>} : memref<8x8x64xf32, #tpu.memory_space<vmem>>, vector<1x8x64xf32>,
    %246 = arith.truncf %242 : vector<8x64xf32> to vector<8x64xbf16>
    %c0_77 = arith.constant 0 : index
    %c0_78 = arith.constant 0 : index
    %247 = vector.load %arg5[%c0_77, %c0_78] : memref<64x256xbf16, #tpu.memory_space<vmem>>, vector<64x256xbf16>
    %cst_79 = arith.constant dense<0.000000e+00> : vector<8x256xf32>
    %248 = tpu.matmul %246, %247, %cst_79 {dimension_numbers = #tpu.dot_dimension_numbers<[1], [0], [0], [1], [0, 0, 1, 1], [], []>} : vector<8x64xbf16>, vector<64x256xbf16>, vector<8x256xf32> -> vector<8x256xf32>
    %249 = vector.extract_strided_slice %0 {offsets = [0, 6], sizes = [8, 1], strides = [1, 1]} : vector<8x8xf32> to vector<8x1xf32>
    %250 = vector.broadcast %249 : vector<8x1xf32> to vector<8x256xf32>
    %251 = vector.broadcast %1 : vector<1x256xf32> to vector<8x256xf32>
    %252 = arith.mulf %250, %251 : vector<8x256xf32>
    %253 = arith.addf %248, %252 : vector<8x256xf32>
    %254 = vector.extract_strided_slice %0 {offsets = [0, 1], sizes = [8, 1], strides = [1, 1]} : vector<8x8xf32> to vector<8x1xf32>
    %255 = vector.broadcast %254 : vector<8x1xf32> to vector<8x256xf32>
    %256 = vector.broadcast %2 : vector<1x256xf32> to vector<8x256xf32>
    %257 = arith.mulf %255, %256 : vector<8x256xf32>
    %258 = arith.addf %253, %257 : vector<8x256xf32>
    %259 = vector.broadcast %3 : vector<1x256xf32> to vector<8x256xf32>
    %260 = arith.addf %258, %259 : vector<8x256xf32>
    %261 = math.tanh %260 : vector<8x256xf32>
    %262 = vector.extract_strided_slice %261 {offsets = [0, 0], sizes = [8, 64], strides = [1, 1]} : vector<8x256xf32> to vector<8x64xf32>
    %263 = vector.extract_strided_slice %261 {offsets = [0, 64], sizes = [8, 64], strides = [1, 1]} : vector<8x256xf32> to vector<8x64xf32>
    %264 = vector.extract_strided_slice %261 {offsets = [0, 128], sizes = [8, 64], strides = [1, 1]} : vector<8x256xf32> to vector<8x64xf32>
    %265 = vector.extract_strided_slice %261 {offsets = [0, 192], sizes = [8, 64], strides = [1, 1]} : vector<8x256xf32> to vector<8x64xf32>
    %cst_80 = arith.constant 1.000000e+00 : f32
    %266 = vector.broadcast %cst_80 : f32 to vector<8x64xf32>
    %267 = arith.addf %262, %266 : vector<8x64xf32>
    %cst_81 = arith.constant 5.000000e-01 : f32
    %268 = vector.broadcast %cst_81 : f32 to vector<8x64xf32>
    %269 = arith.mulf %268, %267 : vector<8x64xf32>
    %cst_82 = arith.constant 1.000000e+00 : f32
    %270 = vector.broadcast %cst_82 : f32 to vector<8x64xf32>
    %271 = arith.addf %263, %270 : vector<8x64xf32>
    %cst_83 = arith.constant 5.000000e-01 : f32
    %272 = vector.broadcast %cst_83 : f32 to vector<8x64xf32>
    %273 = arith.mulf %272, %271 : vector<8x64xf32>
    %cst_84 = arith.constant 1.000000e+00 : f32
    %274 = vector.broadcast %cst_84 : f32 to vector<8x64xf32>
    %275 = arith.addf %265, %274 : vector<8x64xf32>
    %cst_85 = arith.constant 5.000000e-01 : f32
    %276 = vector.broadcast %cst_85 : f32 to vector<8x64xf32>
    %277 = arith.mulf %276, %275 : vector<8x64xf32>
    %278 = arith.mulf %273, %240 : vector<8x64xf32>
    %279 = arith.mulf %269, %264 : vector<8x64xf32>
    %280 = arith.addf %278, %279 : vector<8x64xf32>
    %281 = math.tanh %280 : vector<8x64xf32>
    %282 = arith.mulf %277, %281 : vector<8x64xf32>
    %c6 = arith.constant 6 : index
    %c0_86 = arith.constant 0 : index
    %c0_87 = arith.constant 0 : index
    %283 = vector.load %arg13[%c6, %c0_86, %c0_87] : memref<8x8x64xf32, #tpu.memory_space<vmem>>, vector<1x8x64xf32>
    %284 = vector.shape_cast %283 : vector<1x8x64xf32> to vector<8x64xf32>
    %285 = vector.shape_cast %282 : vector<8x64xf32> to vector<1x8x64xf32>
    tpu.vector_store %arg13[%c6, %c0_86, %c0_87], %285 {strides = array<i32>} : memref<8x8x64xf32, #tpu.memory_space<vmem>>, vector<1x8x64xf32>,
    %286 = arith.truncf %282 : vector<8x64xf32> to vector<8x64xbf16>
    %c0_88 = arith.constant 0 : index
    %c0_89 = arith.constant 0 : index
    %287 = vector.load %arg5[%c0_88, %c0_89] : memref<64x256xbf16, #tpu.memory_space<vmem>>, vector<64x256xbf16>
    %cst_90 = arith.constant dense<0.000000e+00> : vector<8x256xf32>
    %288 = tpu.matmul %286, %287, %cst_90 {dimension_numbers = #tpu.dot_dimension_numbers<[1], [0], [0], [1], [0, 0, 1, 1], [], []>} : vector<8x64xbf16>, vector<64x256xbf16>, vector<8x256xf32> -> vector<8x256xf32>
    %289 = vector.extract_strided_slice %0 {offsets = [0, 7], sizes = [8, 1], strides = [1, 1]} : vector<8x8xf32> to vector<8x1xf32>
    %290 = vector.broadcast %289 : vector<8x1xf32> to vector<8x256xf32>
    %291 = vector.broadcast %1 : vector<1x256xf32> to vector<8x256xf32>
    %292 = arith.mulf %290, %291 : vector<8x256xf32>
    %293 = arith.addf %288, %292 : vector<8x256xf32>
    %294 = vector.extract_strided_slice %0 {offsets = [0, 0], sizes = [8, 1], strides = [1, 1]} : vector<8x8xf32> to vector<8x1xf32>
    %295 = vector.broadcast %294 : vector<8x1xf32> to vector<8x256xf32>
    %296 = vector.broadcast %2 : vector<1x256xf32> to vector<8x256xf32>
    %297 = arith.mulf %295, %296 : vector<8x256xf32>
    %298 = arith.addf %293, %297 : vector<8x256xf32>
    %299 = vector.broadcast %3 : vector<1x256xf32> to vector<8x256xf32>
    %300 = arith.addf %298, %299 : vector<8x256xf32>
    %301 = math.tanh %300 : vector<8x256xf32>
    %302 = vector.extract_strided_slice %301 {offsets = [0, 0], sizes = [8, 64], strides = [1, 1]} : vector<8x256xf32> to vector<8x64xf32>
    %303 = vector.extract_strided_slice %301 {offsets = [0, 64], sizes = [8, 64], strides = [1, 1]} : vector<8x256xf32> to vector<8x64xf32>
    %304 = vector.extract_strided_slice %301 {offsets = [0, 128], sizes = [8, 64], strides = [1, 1]} : vector<8x256xf32> to vector<8x64xf32>
    %305 = vector.extract_strided_slice %301 {offsets = [0, 192], sizes = [8, 64], strides = [1, 1]} : vector<8x256xf32> to vector<8x64xf32>
    %cst_91 = arith.constant 1.000000e+00 : f32
    %306 = vector.broadcast %cst_91 : f32 to vector<8x64xf32>
    %307 = arith.addf %302, %306 : vector<8x64xf32>
    %cst_92 = arith.constant 5.000000e-01 : f32
    %308 = vector.broadcast %cst_92 : f32 to vector<8x64xf32>
    %309 = arith.mulf %308, %307 : vector<8x64xf32>
    %cst_93 = arith.constant 1.000000e+00 : f32
    %310 = vector.broadcast %cst_93 : f32 to vector<8x64xf32>
    %311 = arith.addf %303, %310 : vector<8x64xf32>
    %cst_94 = arith.constant 5.000000e-01 : f32
    %312 = vector.broadcast %cst_94 : f32 to vector<8x64xf32>
    %313 = arith.mulf %312, %311 : vector<8x64xf32>
    %cst_95 = arith.constant 1.000000e+00 : f32
    %314 = vector.broadcast %cst_95 : f32 to vector<8x64xf32>
    %315 = arith.addf %305, %314 : vector<8x64xf32>
    %cst_96 = arith.constant 5.000000e-01 : f32
    %316 = vector.broadcast %cst_96 : f32 to vector<8x64xf32>
    %317 = arith.mulf %316, %315 : vector<8x64xf32>
    %318 = arith.mulf %313, %280 : vector<8x64xf32>
    %319 = arith.mulf %309, %304 : vector<8x64xf32>
    %320 = arith.addf %318, %319 : vector<8x64xf32>
    %321 = math.tanh %320 : vector<8x64xf32>
    %322 = arith.mulf %317, %321 : vector<8x64xf32>
    %c7 = arith.constant 7 : index
    %c0_97 = arith.constant 0 : index
    %c0_98 = arith.constant 0 : index
    %323 = vector.load %arg13[%c7, %c0_97, %c0_98] : memref<8x8x64xf32, #tpu.memory_space<vmem>>, vector<1x8x64xf32>
    %324 = vector.shape_cast %323 : vector<1x8x64xf32> to vector<8x64xf32>
    %325 = vector.shape_cast %322 : vector<8x64xf32> to vector<1x8x64xf32>
    tpu.vector_store %arg13[%c7, %c0_97, %c0_98], %325 {strides = array<i32>} : memref<8x8x64xf32, #tpu.memory_space<vmem>>, vector<1x8x64xf32>,
    %326 = tpu.iota {dimensions = array<i32: 1>} : vector<1x64xi32>
    %c32_i32 = arith.constant 32 : i32
    %327 = vector.broadcast %c32_i32 : i32 to vector<1x64xi32>
    %328 = arith.cmpi slt, %326, %327 : vector<1x64xi32>
    %cst_99 = arith.constant 0.000000e+00 : f32
    %329 = vector.shape_cast %328 : vector<1x64xi1> to vector<1x64xi1>
    %330 = vector.broadcast %329 : vector<1x64xi1> to vector<8x64xi1>
    %331 = vector.broadcast %cst_99 : f32 to vector<8x64xf32>
    %332 = arith.select %330, %322, %331 : vector<8x64xi1>, vector<8x64xf32>
    %cst_100 = arith.constant 0.000000e+00 : f32
    %333 = vector.shape_cast %328 : vector<1x64xi1> to vector<1x64xi1>
    %334 = vector.broadcast %333 : vector<1x64xi1> to vector<8x64xi1>
    %335 = vector.broadcast %cst_100 : f32 to vector<8x64xf32>
    %336 = arith.select %334, %335, %322 : vector<8x64xi1>, vector<8x64xf32>
    %337 = tpu.iota {dimensions = array<i32: 1>} : vector<1x8xi32>
    %cst_101 = arith.constant 0.000000e+00 : f32
    %338 = vector.broadcast %cst_101 : f32 to vector<8x8xf32>
    %c0_102 = arith.constant 0 : index
    %c0_103 = arith.constant 0 : index
    %c0_104 = arith.constant 0 : index
    %339 = vector.load %arg13[%c0_102, %c0_103, %c0_104] : memref<8x8x64xf32, #tpu.memory_space<vmem>>, vector<1x8x64xf32>
    %340 = vector.shape_cast %339 : vector<1x8x64xf32> to vector<8x64xf32>
    %341 = arith.mulf %340, %332 : vector<8x64xf32>
    %c7_105 = arith.constant 7 : index
    %c0_106 = arith.constant 0 : index
    %c0_107 = arith.constant 0 : index
    %342 = vector.load %arg13[%c7_105, %c0_106, %c0_107] : memref<8x8x64xf32, #tpu.memory_space<vmem>>, vector<1x8x64xf32>
    %343 = vector.shape_cast %342 : vector<1x8x64xf32> to vector<8x64xf32>
    %344 = arith.mulf %343, %336 : vector<8x64xf32>
    %345 = arith.addf %341, %344 : vector<8x64xf32>
    %cst_108 = arith.constant dense<0.000000e+00> : vector<8xf32>
    %346 = vector.multi_reduction <add>, %345, %cst_108 [1] : vector<8x64xf32> to vector<8xf32>
    %347 = vector.shape_cast %346 : vector<8xf32> to vector<8x1xf32>
    %cst_109 = arith.constant 1.250000e-01 : f32
    %348 = vector.broadcast %cst_109 : f32 to vector<8x1xf32>
    %349 = arith.mulf %347, %348 : vector<8x1xf32>
    %c0_i32 = arith.constant 0 : i32
    %350 = vector.broadcast %c0_i32 : i32 to vector<1x8xi32>
    %351 = arith.cmpi eq, %337, %350 : vector<1x8xi32>
    %cst_110 = arith.constant 0.000000e+00 : f32
    %352 = vector.shape_cast %351 : vector<1x8xi1> to vector<1x8xi1>
    %353 = vector.broadcast %352 : vector<1x8xi1> to vector<8x8xi1>
    %354 = vector.shape_cast %349 : vector<8x1xf32> to vector<8x1xf32>
    %355 = vector.broadcast %354 : vector<8x1xf32> to vector<8x8xf32>
    %356 = vector.broadcast %cst_110 : f32 to vector<8x8xf32>
    %357 = arith.select %353, %355, %356 : vector<8x8xi1>, vector<8x8xf32>
    %358 = arith.addf %338, %357 : vector<8x8xf32>
    %c1_111 = arith.constant 1 : index
    %c0_112 = arith.constant 0 : index
    %c0_113 = arith.constant 0 : index
    %359 = vector.load %arg13[%c1_111, %c0_112, %c0_113] : memref<8x8x64xf32, #tpu.memory_space<vmem>>, vector<1x8x64xf32>
    %360 = vector.shape_cast %359 : vector<1x8x64xf32> to vector<8x64xf32>
    %361 = arith.mulf %360, %332 : vector<8x64xf32>
    %c6_114 = arith.constant 6 : index
    %c0_115 = arith.constant 0 : index
    %c0_116 = arith.constant 0 : index
    %362 = vector.load %arg13[%c6_114, %c0_115, %c0_116] : memref<8x8x64xf32, #tpu.memory_space<vmem>>, vector<1x8x64xf32>
    %363 = vector.shape_cast %362 : vector<1x8x64xf32> to vector<8x64xf32>
    %364 = arith.mulf %363, %336 : vector<8x64xf32>
    %365 = arith.addf %361, %364 : vector<8x64xf32>
    %cst_117 = arith.constant dense<0.000000e+00> : vector<8xf32>
    %366 = vector.multi_reduction <add>, %365, %cst_117 [1] : vector<8x64xf32> to vector<8xf32>
    %367 = vector.shape_cast %366 : vector<8xf32> to vector<8x1xf32>
    %cst_118 = arith.constant 1.250000e-01 : f32
    %368 = vector.broadcast %cst_118 : f32 to vector<8x1xf32>
    %369 = arith.mulf %367, %368 : vector<8x1xf32>
    %c1_i32 = arith.constant 1 : i32
    %370 = vector.broadcast %c1_i32 : i32 to vector<1x8xi32>
    %371 = arith.cmpi eq, %337, %370 : vector<1x8xi32>
    %cst_119 = arith.constant 0.000000e+00 : f32
    %372 = vector.shape_cast %371 : vector<1x8xi1> to vector<1x8xi1>
    %373 = vector.broadcast %372 : vector<1x8xi1> to vector<8x8xi1>
    %374 = vector.shape_cast %369 : vector<8x1xf32> to vector<8x1xf32>
    %375 = vector.broadcast %374 : vector<8x1xf32> to vector<8x8xf32>
    %376 = vector.broadcast %cst_119 : f32 to vector<8x8xf32>
    %377 = arith.select %373, %375, %376 : vector<8x8xi1>, vector<8x8xf32>
    %378 = arith.addf %358, %377 : vector<8x8xf32>
    %c2_120 = arith.constant 2 : index
    %c0_121 = arith.constant 0 : index
    %c0_122 = arith.constant 0 : index
    %379 = vector.load %arg13[%c2_120, %c0_121, %c0_122] : memref<8x8x64xf32, #tpu.memory_space<vmem>>, vector<1x8x64xf32>
    %380 = vector.shape_cast %379 : vector<1x8x64xf32> to vector<8x64xf32>
    %381 = arith.mulf %380, %332 : vector<8x64xf32>
    %c5_123 = arith.constant 5 : index
    %c0_124 = arith.constant 0 : index
    %c0_125 = arith.constant 0 : index
    %382 = vector.load %arg13[%c5_123, %c0_124, %c0_125] : memref<8x8x64xf32, #tpu.memory_space<vmem>>, vector<1x8x64xf32>
    %383 = vector.shape_cast %382 : vector<1x8x64xf32> to vector<8x64xf32>
    %384 = arith.mulf %383, %336 : vector<8x64xf32>
    %385 = arith.addf %381, %384 : vector<8x64xf32>
    %cst_126 = arith.constant dense<0.000000e+00> : vector<8xf32>
    %386 = vector.multi_reduction <add>, %385, %cst_126 [1] : vector<8x64xf32> to vector<8xf32>
    %387 = vector.shape_cast %386 : vector<8xf32> to vector<8x1xf32>
    %cst_127 = arith.constant 1.250000e-01 : f32
    %388 = vector.broadcast %cst_127 : f32 to vector<8x1xf32>
    %389 = arith.mulf %387, %388 : vector<8x1xf32>
    %c2_i32 = arith.constant 2 : i32
    %390 = vector.broadcast %c2_i32 : i32 to vector<1x8xi32>
    %391 = arith.cmpi eq, %337, %390 : vector<1x8xi32>
    %cst_128 = arith.constant 0.000000e+00 : f32
    %392 = vector.shape_cast %391 : vector<1x8xi1> to vector<1x8xi1>
    %393 = vector.broadcast %392 : vector<1x8xi1> to vector<8x8xi1>
    %394 = vector.shape_cast %389 : vector<8x1xf32> to vector<8x1xf32>
    %395 = vector.broadcast %394 : vector<8x1xf32> to vector<8x8xf32>
    %396 = vector.broadcast %cst_128 : f32 to vector<8x8xf32>
    %397 = arith.select %393, %395, %396 : vector<8x8xi1>, vector<8x8xf32>
    %398 = arith.addf %378, %397 : vector<8x8xf32>
    %c3_129 = arith.constant 3 : index
    %c0_130 = arith.constant 0 : index
    %c0_131 = arith.constant 0 : index
    %399 = vector.load %arg13[%c3_129, %c0_130, %c0_131] : memref<8x8x64xf32, #tpu.memory_space<vmem>>, vector<1x8x64xf32>
    %400 = vector.shape_cast %399 : vector<1x8x64xf32> to vector<8x64xf32>
    %401 = arith.mulf %400, %332 : vector<8x64xf32>
    %c4_132 = arith.constant 4 : index
    %c0_133 = arith.constant 0 : index
    %c0_134 = arith.constant 0 : index
    %402 = vector.load %arg13[%c4_132, %c0_133, %c0_134] : memref<8x8x64xf32, #tpu.memory_space<vmem>>, vector<1x8x64xf32>
    %403 = vector.shape_cast %402 : vector<1x8x64xf32> to vector<8x64xf32>
    %404 = arith.mulf %403, %336 : vector<8x64xf32>
    %405 = arith.addf %401, %404 : vector<8x64xf32>
    %cst_135 = arith.constant dense<0.000000e+00> : vector<8xf32>
    %406 = vector.multi_reduction <add>, %405, %cst_135 [1] : vector<8x64xf32> to vector<8xf32>
    %407 = vector.shape_cast %406 : vector<8xf32> to vector<8x1xf32>
    %cst_136 = arith.constant 1.250000e-01 : f32
    %408 = vector.broadcast %cst_136 : f32 to vector<8x1xf32>
    %409 = arith.mulf %407, %408 : vector<8x1xf32>
    %c3_i32 = arith.constant 3 : i32
    %410 = vector.broadcast %c3_i32 : i32 to vector<1x8xi32>
    %411 = arith.cmpi eq, %337, %410 : vector<1x8xi32>
    %cst_137 = arith.constant 0.000000e+00 : f32
    %412 = vector.shape_cast %411 : vector<1x8xi1> to vector<1x8xi1>
    %413 = vector.broadcast %412 : vector<1x8xi1> to vector<8x8xi1>
    %414 = vector.shape_cast %409 : vector<8x1xf32> to vector<8x1xf32>
    %415 = vector.broadcast %414 : vector<8x1xf32> to vector<8x8xf32>
    %416 = vector.broadcast %cst_137 : f32 to vector<8x8xf32>
    %417 = arith.select %413, %415, %416 : vector<8x8xi1>, vector<8x8xf32>
    %418 = arith.addf %398, %417 : vector<8x8xf32>
    %c4_138 = arith.constant 4 : index
    %c0_139 = arith.constant 0 : index
    %c0_140 = arith.constant 0 : index
    %419 = vector.load %arg13[%c4_138, %c0_139, %c0_140] : memref<8x8x64xf32, #tpu.memory_space<vmem>>, vector<1x8x64xf32>
    %420 = vector.shape_cast %419 : vector<1x8x64xf32> to vector<8x64xf32>
    %421 = arith.mulf %420, %332 : vector<8x64xf32>
    %c3_141 = arith.constant 3 : index
    %c0_142 = arith.constant 0 : index
    %c0_143 = arith.constant 0 : index
    %422 = vector.load %arg13[%c3_141, %c0_142, %c0_143] : memref<8x8x64xf32, #tpu.memory_space<vmem>>, vector<1x8x64xf32>
    %423 = vector.shape_cast %422 : vector<1x8x64xf32> to vector<8x64xf32>
    %424 = arith.mulf %423, %336 : vector<8x64xf32>
    %425 = arith.addf %421, %424 : vector<8x64xf32>
    %cst_144 = arith.constant dense<0.000000e+00> : vector<8xf32>
    %426 = vector.multi_reduction <add>, %425, %cst_144 [1] : vector<8x64xf32> to vector<8xf32>
    %427 = vector.shape_cast %426 : vector<8xf32> to vector<8x1xf32>
    %cst_145 = arith.constant 1.250000e-01 : f32
    %428 = vector.broadcast %cst_145 : f32 to vector<8x1xf32>
    %429 = arith.mulf %427, %428 : vector<8x1xf32>
    %c4_i32 = arith.constant 4 : i32
    %430 = vector.broadcast %c4_i32 : i32 to vector<1x8xi32>
    %431 = arith.cmpi eq, %337, %430 : vector<1x8xi32>
    %cst_146 = arith.constant 0.000000e+00 : f32
    %432 = vector.shape_cast %431 : vector<1x8xi1> to vector<1x8xi1>
    %433 = vector.broadcast %432 : vector<1x8xi1> to vector<8x8xi1>
    %434 = vector.shape_cast %429 : vector<8x1xf32> to vector<8x1xf32>
    %435 = vector.broadcast %434 : vector<8x1xf32> to vector<8x8xf32>
    %436 = vector.broadcast %cst_146 : f32 to vector<8x8xf32>
    %437 = arith.select %433, %435, %436 : vector<8x8xi1>, vector<8x8xf32>
    %438 = arith.addf %418, %437 : vector<8x8xf32>
    %c5_147 = arith.constant 5 : index
    %c0_148 = arith.constant 0 : index
    %c0_149 = arith.constant 0 : index
    %439 = vector.load %arg13[%c5_147, %c0_148, %c0_149] : memref<8x8x64xf32, #tpu.memory_space<vmem>>, vector<1x8x64xf32>
    %440 = vector.shape_cast %439 : vector<1x8x64xf32> to vector<8x64xf32>
    %441 = arith.mulf %440, %332 : vector<8x64xf32>
    %c2_150 = arith.constant 2 : index
    %c0_151 = arith.constant 0 : index
    %c0_152 = arith.constant 0 : index
    %442 = vector.load %arg13[%c2_150, %c0_151, %c0_152] : memref<8x8x64xf32, #tpu.memory_space<vmem>>, vector<1x8x64xf32>
    %443 = vector.shape_cast %442 : vector<1x8x64xf32> to vector<8x64xf32>
    %444 = arith.mulf %443, %336 : vector<8x64xf32>
    %445 = arith.addf %441, %444 : vector<8x64xf32>
    %cst_153 = arith.constant dense<0.000000e+00> : vector<8xf32>
    %446 = vector.multi_reduction <add>, %445, %cst_153 [1] : vector<8x64xf32> to vector<8xf32>
    %447 = vector.shape_cast %446 : vector<8xf32> to vector<8x1xf32>
    %cst_154 = arith.constant 1.250000e-01 : f32
    %448 = vector.broadcast %cst_154 : f32 to vector<8x1xf32>
    %449 = arith.mulf %447, %448 : vector<8x1xf32>
    %c5_i32 = arith.constant 5 : i32
    %450 = vector.broadcast %c5_i32 : i32 to vector<1x8xi32>
    %451 = arith.cmpi eq, %337, %450 : vector<1x8xi32>
    %cst_155 = arith.constant 0.000000e+00 : f32
    %452 = vector.shape_cast %451 : vector<1x8xi1> to vector<1x8xi1>
    %453 = vector.broadcast %452 : vector<1x8xi1> to vector<8x8xi1>
    %454 = vector.shape_cast %449 : vector<8x1xf32> to vector<8x1xf32>
    %455 = vector.broadcast %454 : vector<8x1xf32> to vector<8x8xf32>
    %456 = vector.broadcast %cst_155 : f32 to vector<8x8xf32>
    %457 = arith.select %453, %455, %456 : vector<8x8xi1>, vector<8x8xf32>
    %458 = arith.addf %438, %457 : vector<8x8xf32>
    %c6_156 = arith.constant 6 : index
    %c0_157 = arith.constant 0 : index
    %c0_158 = arith.constant 0 : index
    %459 = vector.load %arg13[%c6_156, %c0_157, %c0_158] : memref<8x8x64xf32, #tpu.memory_space<vmem>>, vector<1x8x64xf32>
    %460 = vector.shape_cast %459 : vector<1x8x64xf32> to vector<8x64xf32>
    %461 = arith.mulf %460, %332 : vector<8x64xf32>
    %c1_159 = arith.constant 1 : index
    %c0_160 = arith.constant 0 : index
    %c0_161 = arith.constant 0 : index
    %462 = vector.load %arg13[%c1_159, %c0_160, %c0_161] : memref<8x8x64xf32, #tpu.memory_space<vmem>>, vector<1x8x64xf32>
    %463 = vector.shape_cast %462 : vector<1x8x64xf32> to vector<8x64xf32>
    %464 = arith.mulf %463, %336 : vector<8x64xf32>
    %465 = arith.addf %461, %464 : vector<8x64xf32>
    %cst_162 = arith.constant dense<0.000000e+00> : vector<8xf32>
    %466 = vector.multi_reduction <add>, %465, %cst_162 [1] : vector<8x64xf32> to vector<8xf32>
    %467 = vector.shape_cast %466 : vector<8xf32> to vector<8x1xf32>
    %cst_163 = arith.constant 1.250000e-01 : f32
    %468 = vector.broadcast %cst_163 : f32 to vector<8x1xf32>
    %469 = arith.mulf %467, %468 : vector<8x1xf32>
    %c6_i32 = arith.constant 6 : i32
    %470 = vector.broadcast %c6_i32 : i32 to vector<1x8xi32>
    %471 = arith.cmpi eq, %337, %470 : vector<1x8xi32>
    %cst_164 = arith.constant 0.000000e+00 : f32
    %472 = vector.shape_cast %471 : vector<1x8xi1> to vector<1x8xi1>
    %473 = vector.broadcast %472 : vector<1x8xi1> to vector<8x8xi1>
    %474 = vector.shape_cast %469 : vector<8x1xf32> to vector<8x1xf32>
    %475 = vector.broadcast %474 : vector<8x1xf32> to vector<8x8xf32>
    %476 = vector.broadcast %cst_164 : f32 to vector<8x8xf32>
    %477 = arith.select %473, %475, %476 : vector<8x8xi1>, vector<8x8xf32>
    %478 = arith.addf %458, %477 : vector<8x8xf32>
    %c7_165 = arith.constant 7 : index
    %c0_166 = arith.constant 0 : index
    %c0_167 = arith.constant 0 : index
    %479 = vector.load %arg13[%c7_165, %c0_166, %c0_167] : memref<8x8x64xf32, #tpu.memory_space<vmem>>, vector<1x8x64xf32>
    %480 = vector.shape_cast %479 : vector<1x8x64xf32> to vector<8x64xf32>
    %481 = arith.mulf %480, %332 : vector<8x64xf32>
    %c0_168 = arith.constant 0 : index
    %c0_169 = arith.constant 0 : index
    %c0_170 = arith.constant 0 : index
    %482 = vector.load %arg13[%c0_168, %c0_169, %c0_170] : memref<8x8x64xf32, #tpu.memory_space<vmem>>, vector<1x8x64xf32>
    %483 = vector.shape_cast %482 : vector<1x8x64xf32> to vector<8x64xf32>
    %484 = arith.mulf %483, %336 : vector<8x64xf32>
    %485 = arith.addf %481, %484 : vector<8x64xf32>
    %cst_171 = arith.constant dense<0.000000e+00> : vector<8xf32>
    %486 = vector.multi_reduction <add>, %485, %cst_171 [1] : vector<8x64xf32> to vector<8xf32>
    %487 = vector.shape_cast %486 : vector<8xf32> to vector<8x1xf32>
    %cst_172 = arith.constant 1.250000e-01 : f32
    %488 = vector.broadcast %cst_172 : f32 to vector<8x1xf32>
    %489 = arith.mulf %487, %488 : vector<8x1xf32>
    %c7_i32 = arith.constant 7 : i32
    %490 = vector.broadcast %c7_i32 : i32 to vector<1x8xi32>
    %491 = arith.cmpi eq, %337, %490 : vector<1x8xi32>
    %cst_173 = arith.constant 0.000000e+00 : f32
    %492 = vector.shape_cast %491 : vector<1x8xi1> to vector<1x8xi1>
    %493 = vector.broadcast %492 : vector<1x8xi1> to vector<8x8xi1>
    %494 = vector.shape_cast %489 : vector<8x1xf32> to vector<8x1xf32>
    %495 = vector.broadcast %494 : vector<8x1xf32> to vector<8x8xf32>
    %496 = vector.broadcast %cst_173 : f32 to vector<8x8xf32>
    %497 = arith.select %493, %495, %496 : vector<8x8xi1>, vector<8x8xf32>
    %498 = arith.addf %478, %497 : vector<8x8xf32>
    %cst_174 = arith.constant dense<0xFF800000> : vector<8xf32>
    %499 = vector.multi_reduction <maximumf>, %498, %cst_174 [1] : vector<8x8xf32> to vector<8xf32>
    %500 = vector.shape_cast %499 : vector<8xf32> to vector<8x1xf32>
    %501 = vector.broadcast %500 : vector<8x1xf32> to vector<8x8xf32>
    %502 = arith.subf %498, %501 : vector<8x8xf32>
    %503 = math.exp %502 : vector<8x8xf32>
    %cst_175 = arith.constant dense<0.000000e+00> : vector<8xf32>
    %504 = vector.multi_reduction <add>, %503, %cst_175 [1] : vector<8x8xf32> to vector<8xf32>
    %505 = vector.shape_cast %504 : vector<8xf32> to vector<8x1xf32>
    %506 = tpu.reciprocal %505 {approx = true} : vector<8x1xf32> -> vector<8x1xf32>
    %507 = vector.broadcast %506 : vector<8x1xf32> to vector<8x8xf32>
    %508 = arith.mulf %503, %507 : vector<8x8xf32>
    %cst_176 = arith.constant 0.000000e+00 : f32
    %509 = vector.broadcast %cst_176 : f32 to vector<8x64xf32>
    %510 = vector.extract_strided_slice %508 {offsets = [0, 0], sizes = [8, 1], strides = [1, 1]} : vector<8x8xf32> to vector<8x1xf32>
    %511 = vector.extract_strided_slice %508 {offsets = [0, 7], sizes = [8, 1], strides = [1, 1]} : vector<8x8xf32> to vector<8x1xf32>
    %512 = vector.shape_cast %328 : vector<1x64xi1> to vector<1x64xi1>
    %513 = vector.broadcast %512 : vector<1x64xi1> to vector<8x64xi1>
    %514 = vector.shape_cast %510 : vector<8x1xf32> to vector<8x1xf32>
    %515 = vector.broadcast %514 : vector<8x1xf32> to vector<8x64xf32>
    %516 = vector.shape_cast %511 : vector<8x1xf32> to vector<8x1xf32>
    %517 = vector.broadcast %516 : vector<8x1xf32> to vector<8x64xf32>
    %518 = arith.select %513, %515, %517 : vector<8x64xi1>, vector<8x64xf32>
    %c0_177 = arith.constant 0 : index
    %c0_178 = arith.constant 0 : index
    %c0_179 = arith.constant 0 : index
    %519 = vector.load %arg13[%c0_177, %c0_178, %c0_179] : memref<8x8x64xf32, #tpu.memory_space<vmem>>, vector<1x8x64xf32>
    %520 = vector.shape_cast %519 : vector<1x8x64xf32> to vector<8x64xf32>
    %521 = arith.mulf %518, %520 : vector<8x64xf32>
    %522 = arith.addf %509, %521 : vector<8x64xf32>
    %523 = vector.extract_strided_slice %508 {offsets = [0, 1], sizes = [8, 1], strides = [1, 1]} : vector<8x8xf32> to vector<8x1xf32>
    %524 = vector.extract_strided_slice %508 {offsets = [0, 6], sizes = [8, 1], strides = [1, 1]} : vector<8x8xf32> to vector<8x1xf32>
    %525 = vector.shape_cast %328 : vector<1x64xi1> to vector<1x64xi1>
    %526 = vector.broadcast %525 : vector<1x64xi1> to vector<8x64xi1>
    %527 = vector.shape_cast %523 : vector<8x1xf32> to vector<8x1xf32>
    %528 = vector.broadcast %527 : vector<8x1xf32> to vector<8x64xf32>
    %529 = vector.shape_cast %524 : vector<8x1xf32> to vector<8x1xf32>
    %530 = vector.broadcast %529 : vector<8x1xf32> to vector<8x64xf32>
    %531 = arith.select %526, %528, %530 : vector<8x64xi1>, vector<8x64xf32>
    %c1_180 = arith.constant 1 : index
    %c0_181 = arith.constant 0 : index
    %c0_182 = arith.constant 0 : index
    %532 = vector.load %arg13[%c1_180, %c0_181, %c0_182] : memref<8x8x64xf32, #tpu.memory_space<vmem>>, vector<1x8x64xf32>
    %533 = vector.shape_cast %532 : vector<1x8x64xf32> to vector<8x64xf32>
    %534 = arith.mulf %531, %533 : vector<8x64xf32>
    %535 = arith.addf %522, %534 : vector<8x64xf32>
    %536 = vector.extract_strided_slice %508 {offsets = [0, 2], sizes = [8, 1], strides = [1, 1]} : vector<8x8xf32> to vector<8x1xf32>
    %537 = vector.extract_strided_slice %508 {offsets = [0, 5], sizes = [8, 1], strides = [1, 1]} : vector<8x8xf32> to vector<8x1xf32>
    %538 = vector.shape_cast %328 : vector<1x64xi1> to vector<1x64xi1>
    %539 = vector.broadcast %538 : vector<1x64xi1> to vector<8x64xi1>
    %540 = vector.shape_cast %536 : vector<8x1xf32> to vector<8x1xf32>
    %541 = vector.broadcast %540 : vector<8x1xf32> to vector<8x64xf32>
    %542 = vector.shape_cast %537 : vector<8x1xf32> to vector<8x1xf32>
    %543 = vector.broadcast %542 : vector<8x1xf32> to vector<8x64xf32>
    %544 = arith.select %539, %541, %543 : vector<8x64xi1>, vector<8x64xf32>
    %c2_183 = arith.constant 2 : index
    %c0_184 = arith.constant 0 : index
    %c0_185 = arith.constant 0 : index
    %545 = vector.load %arg13[%c2_183, %c0_184, %c0_185] : memref<8x8x64xf32, #tpu.memory_space<vmem>>, vector<1x8x64xf32>
    %546 = vector.shape_cast %545 : vector<1x8x64xf32> to vector<8x64xf32>
    %547 = arith.mulf %544, %546 : vector<8x64xf32>
    %548 = arith.addf %535, %547 : vector<8x64xf32>
    %549 = vector.extract_strided_slice %508 {offsets = [0, 3], sizes = [8, 1], strides = [1, 1]} : vector<8x8xf32> to vector<8x1xf32>
    %550 = vector.extract_strided_slice %508 {offsets = [0, 4], sizes = [8, 1], strides = [1, 1]} : vector<8x8xf32> to vector<8x1xf32>
    %551 = vector.shape_cast %328 : vector<1x64xi1> to vector<1x64xi1>
    %552 = vector.broadcast %551 : vector<1x64xi1> to vector<8x64xi1>
    %553 = vector.shape_cast %549 : vector<8x1xf32> to vector<8x1xf32>
    %554 = vector.broadcast %553 : vector<8x1xf32> to vector<8x64xf32>
    %555 = vector.shape_cast %550 : vector<8x1xf32> to vector<8x1xf32>
    %556 = vector.broadcast %555 : vector<8x1xf32> to vector<8x64xf32>
    %557 = arith.select %552, %554, %556 : vector<8x64xi1>, vector<8x64xf32>
    %c3_186 = arith.constant 3 : index
    %c0_187 = arith.constant 0 : index
    %c0_188 = arith.constant 0 : index
    %558 = vector.load %arg13[%c3_186, %c0_187, %c0_188] : memref<8x8x64xf32, #tpu.memory_space<vmem>>, vector<1x8x64xf32>
    %559 = vector.shape_cast %558 : vector<1x8x64xf32> to vector<8x64xf32>
    %560 = arith.mulf %557, %559 : vector<8x64xf32>
    %561 = arith.addf %548, %560 : vector<8x64xf32>
    %562 = vector.extract_strided_slice %508 {offsets = [0, 4], sizes = [8, 1], strides = [1, 1]} : vector<8x8xf32> to vector<8x1xf32>
    %563 = vector.extract_strided_slice %508 {offsets = [0, 3], sizes = [8, 1], strides = [1, 1]} : vector<8x8xf32> to vector<8x1xf32>
    %564 = vector.shape_cast %328 : vector<1x64xi1> to vector<1x64xi1>
    %565 = vector.broadcast %564 : vector<1x64xi1> to vector<8x64xi1>
    %566 = vector.shape_cast %562 : vector<8x1xf32> to vector<8x1xf32>
    %567 = vector.broadcast %566 : vector<8x1xf32> to vector<8x64xf32>
    %568 = vector.shape_cast %563 : vector<8x1xf32> to vector<8x1xf32>
    %569 = vector.broadcast %568 : vector<8x1xf32> to vector<8x64xf32>
    %570 = arith.select %565, %567, %569 : vector<8x64xi1>, vector<8x64xf32>
    %c4_189 = arith.constant 4 : index
    %c0_190 = arith.constant 0 : index
    %c0_191 = arith.constant 0 : index
    %571 = vector.load %arg13[%c4_189, %c0_190, %c0_191] : memref<8x8x64xf32, #tpu.memory_space<vmem>>, vector<1x8x64xf32>
    %572 = vector.shape_cast %571 : vector<1x8x64xf32> to vector<8x64xf32>
    %573 = arith.mulf %570, %572 : vector<8x64xf32>
    %574 = arith.addf %561, %573 : vector<8x64xf32>
    %575 = vector.extract_strided_slice %508 {offsets = [0, 5], sizes = [8, 1], strides = [1, 1]} : vector<8x8xf32> to vector<8x1xf32>
    %576 = vector.extract_strided_slice %508 {offsets = [0, 2], sizes = [8, 1], strides = [1, 1]} : vector<8x8xf32> to vector<8x1xf32>
    %577 = vector.shape_cast %328 : vector<1x64xi1> to vector<1x64xi1>
    %578 = vector.broadcast %577 : vector<1x64xi1> to vector<8x64xi1>
    %579 = vector.shape_cast %575 : vector<8x1xf32> to vector<8x1xf32>
    %580 = vector.broadcast %579 : vector<8x1xf32> to vector<8x64xf32>
    %581 = vector.shape_cast %576 : vector<8x1xf32> to vector<8x1xf32>
    %582 = vector.broadcast %581 : vector<8x1xf32> to vector<8x64xf32>
    %583 = arith.select %578, %580, %582 : vector<8x64xi1>, vector<8x64xf32>
    %c5_192 = arith.constant 5 : index
    %c0_193 = arith.constant 0 : index
    %c0_194 = arith.constant 0 : index
    %584 = vector.load %arg13[%c5_192, %c0_193, %c0_194] : memref<8x8x64xf32, #tpu.memory_space<vmem>>, vector<1x8x64xf32>
    %585 = vector.shape_cast %584 : vector<1x8x64xf32> to vector<8x64xf32>
    %586 = arith.mulf %583, %585 : vector<8x64xf32>
    %587 = arith.addf %574, %586 : vector<8x64xf32>
    %588 = vector.extract_strided_slice %508 {offsets = [0, 6], sizes = [8, 1], strides = [1, 1]} : vector<8x8xf32> to vector<8x1xf32>
    %589 = vector.extract_strided_slice %508 {offsets = [0, 1], sizes = [8, 1], strides = [1, 1]} : vector<8x8xf32> to vector<8x1xf32>
    %590 = vector.shape_cast %328 : vector<1x64xi1> to vector<1x64xi1>
    %591 = vector.broadcast %590 : vector<1x64xi1> to vector<8x64xi1>
    %592 = vector.shape_cast %588 : vector<8x1xf32> to vector<8x1xf32>
    %593 = vector.broadcast %592 : vector<8x1xf32> to vector<8x64xf32>
    %594 = vector.shape_cast %589 : vector<8x1xf32> to vector<8x1xf32>
    %595 = vector.broadcast %594 : vector<8x1xf32> to vector<8x64xf32>
    %596 = arith.select %591, %593, %595 : vector<8x64xi1>, vector<8x64xf32>
    %c6_195 = arith.constant 6 : index
    %c0_196 = arith.constant 0 : index
    %c0_197 = arith.constant 0 : index
    %597 = vector.load %arg13[%c6_195, %c0_196, %c0_197] : memref<8x8x64xf32, #tpu.memory_space<vmem>>, vector<1x8x64xf32>
    %598 = vector.shape_cast %597 : vector<1x8x64xf32> to vector<8x64xf32>
    %599 = arith.mulf %596, %598 : vector<8x64xf32>
    %600 = arith.addf %587, %599 : vector<8x64xf32>
    %601 = vector.extract_strided_slice %508 {offsets = [0, 7], sizes = [8, 1], strides = [1, 1]} : vector<8x8xf32> to vector<8x1xf32>
    %602 = vector.extract_strided_slice %508 {offsets = [0, 0], sizes = [8, 1], strides = [1, 1]} : vector<8x8xf32> to vector<8x1xf32>
    %603 = vector.shape_cast %328 : vector<1x64xi1> to vector<1x64xi1>
    %604 = vector.broadcast %603 : vector<1x64xi1> to vector<8x64xi1>
    %605 = vector.shape_cast %601 : vector<8x1xf32> to vector<8x1xf32>
    %606 = vector.broadcast %605 : vector<8x1xf32> to vector<8x64xf32>
    %607 = vector.shape_cast %602 : vector<8x1xf32> to vector<8x1xf32>
    %608 = vector.broadcast %607 : vector<8x1xf32> to vector<8x64xf32>
    %609 = arith.select %604, %606, %608 : vector<8x64xi1>, vector<8x64xf32>
    %c7_198 = arith.constant 7 : index
    %c0_199 = arith.constant 0 : index
    %c0_200 = arith.constant 0 : index
    %610 = vector.load %arg13[%c7_198, %c0_199, %c0_200] : memref<8x8x64xf32, #tpu.memory_space<vmem>>, vector<1x8x64xf32>
    %611 = vector.shape_cast %610 : vector<1x8x64xf32> to vector<8x64xf32>
    %612 = arith.mulf %609, %611 : vector<8x64xf32>
    %613 = arith.addf %600, %612 : vector<8x64xf32>
    %614 = arith.truncf %322 : vector<8x64xf32> to vector<8x64xbf16>
    %c0_201 = arith.constant 0 : index
    %c0_202 = arith.constant 0 : index
    %615 = vector.load %arg8[%c0_201, %c0_202] : memref<64x128xbf16, #tpu.memory_space<vmem>>, vector<64x128xbf16>
    %cst_203 = arith.constant dense<0.000000e+00> : vector<8x128xf32>
    %616 = tpu.matmul %614, %615, %cst_203 {dimension_numbers = #tpu.dot_dimension_numbers<[1], [0], [0], [1], [0, 0, 1, 1], [], []>} : vector<8x64xbf16>, vector<64x128xbf16>, vector<8x128xf32> -> vector<8x128xf32>
    %617 = arith.truncf %613 : vector<8x64xf32> to vector<8x64xbf16>
    %c0_204 = arith.constant 0 : index
    %c0_205 = arith.constant 0 : index
    %618 = vector.load %arg9[%c0_204, %c0_205] : memref<64x128xbf16, #tpu.memory_space<vmem>>, vector<64x128xbf16>
    %cst_206 = arith.constant dense<0.000000e+00> : vector<8x128xf32>
    %619 = tpu.matmul %617, %618, %cst_206 {dimension_numbers = #tpu.dot_dimension_numbers<[1], [0], [0], [1], [0, 0, 1, 1], [], []>} : vector<8x64xbf16>, vector<64x128xbf16>, vector<8x128xf32> -> vector<8x128xf32>
    %620 = arith.addf %616, %619 : vector<8x128xf32>
    %c0_207 = arith.constant 0 : index
    %c0_208 = arith.constant 0 : index
    %621 = vector.load %arg10[%c0_207, %c0_208] : memref<1x128xf32, #tpu.memory_space<vmem>>, vector<1x128xf32>
    %622 = vector.broadcast %621 : vector<1x128xf32> to vector<8x128xf32>
    %623 = arith.addf %620, %622 : vector<8x128xf32>
    %624 = tpu.iota {dimensions = array<i32: 1>} : vector<1x128xi32>
    %c2_i32_209 = arith.constant 2 : i32
    %625 = vector.broadcast %c2_i32_209 : i32 to vector<1x128xi32>
    %626 = arith.cmpi slt, %624, %625 : vector<1x128xi32>
    %cst_210 = arith.constant -1.000000e+30 : f32
    %627 = vector.shape_cast %626 : vector<1x128xi1> to vector<1x128xi1>
    %628 = vector.broadcast %627 : vector<1x128xi1> to vector<8x128xi1>
    %629 = vector.broadcast %cst_210 : f32 to vector<8x128xf32>
    %630 = arith.select %628, %623, %629 : vector<8x128xi1>, vector<8x128xf32>
    %cst_211 = arith.constant dense<0xFF800000> : vector<8xf32>
    %631 = vector.multi_reduction <maximumf>, %630, %cst_211 [1] : vector<8x128xf32> to vector<8xf32>
    %632 = vector.shape_cast %631 : vector<8xf32> to vector<8x1xf32>
    %633 = vector.broadcast %632 : vector<8x1xf32> to vector<8x128xf32>
    %634 = arith.subf %630, %633 : vector<8x128xf32>
    %635 = math.exp %634 : vector<8x128xf32>
    %cst_212 = arith.constant dense<0.000000e+00> : vector<8xf32>
    %636 = vector.multi_reduction <add>, %635, %cst_212 [1] : vector<8x128xf32> to vector<8xf32>
    %637 = vector.shape_cast %636 : vector<8xf32> to vector<8x1xf32>
    %638 = tpu.reciprocal %637 {approx = true} : vector<8x1xf32> -> vector<8x1xf32>
    %639 = vector.broadcast %638 : vector<8x1xf32> to vector<8x128xf32>
    %640 = arith.mulf %635, %639 : vector<8x128xf32>
    %c0_213 = arith.constant 0 : index
    %c0_214 = arith.constant 0 : index
    %641 = vector.load %arg11[%c0_213, %c0_214] : memref<8x128xf32, #tpu.memory_space<vmem>>, vector<8x128xf32>
    tpu.vector_store %arg11[%c0_213, %c0_214], %623 {strides = array<i32>} : memref<8x128xf32, #tpu.memory_space<vmem>>, vector<8x128xf32>,
    %c0_215 = arith.constant 0 : index
    %c0_216 = arith.constant 0 : index
    %642 = vector.load %arg12[%c0_215, %c0_216] : memref<8x128xf32, #tpu.memory_space<vmem>>, vector<8x128xf32>
    tpu.vector_store %arg12[%c0_215, %c0_216], %640 {strides = array<i32>} : memref<8x128xf32, #tpu.memory_space<vmem>>, vector<8x128xf32>,
    return
  }
  func.func @transform_0(%arg0: i32) -> (i32, i32) {
    %c0_i32 = arith.constant 0 : i32
    %c0_i32_0 = arith.constant 0 : i32
    return %arg0, %c0_i32 : i32, i32
  }
  func.func @transform_1(%arg0: i32) -> (i32, i32) {
    %c0_i32 = arith.constant 0 : i32
    %c0_i32_0 = arith.constant 0 : i32
    %c0_i32_1 = arith.constant 0 : i32
    return %c0_i32, %c0_i32_0 : i32, i32
  }
  func.func @transform_2(%arg0: i32) -> (i32, i32) {
    %c0_i32 = arith.constant 0 : i32
    %c0_i32_0 = arith.constant 0 : i32
    %c0_i32_1 = arith.constant 0 : i32
    return %c0_i32, %c0_i32_0 : i32, i32
  }
  func.func @transform_3(%arg0: i32) -> (i32, i32) {
    %c0_i32 = arith.constant 0 : i32
    %c0_i32_0 = arith.constant 0 : i32
    %c0_i32_1 = arith.constant 0 : i32
    return %c0_i32, %c0_i32_0 : i32, i32
  }
  func.func @transform_4(%arg0: i32) -> (i32, i32) {
    %c0_i32 = arith.constant 0 : i32
    %c0_i32_0 = arith.constant 0 : i32
    %c0_i32_1 = arith.constant 0 : i32
    return %c0_i32, %c0_i32_0 : i32, i32
  }
  func.func @transform_5(%arg0: i32) -> (i32, i32) {
    %c0_i32 = arith.constant 0 : i32
    %c0_i32_0 = arith.constant 0 : i32
    return %arg0, %c0_i32 : i32, i32
  }
  func.func @transform_6(%arg0: i32) -> (i32, i32) {
    %c0_i32 = arith.constant 0 : i32
    %c0_i32_0 = arith.constant 0 : i32
    return %arg0, %c0_i32 : i32, i32
  }
  func.func @transform_7(%arg0: i32) -> (i32, i32) {
    %c0_i32 = arith.constant 0 : i32
    %c0_i32_0 = arith.constant 0 : i32
    %c0_i32_1 = arith.constant 0 : i32
    return %c0_i32, %c0_i32_0 : i32, i32
  }
  func.func @transform_8(%arg0: i32) -> (i32, i32) {
    %c0_i32 = arith.constant 0 : i32
    %c0_i32_0 = arith.constant 0 : i32
    %c0_i32_1 = arith.constant 0 : i32
    return %c0_i32, %c0_i32_0 : i32, i32
  }
  func.func @transform_9(%arg0: i32) -> (i32, i32) {
    %c0_i32 = arith.constant 0 : i32
    %c0_i32_0 = arith.constant 0 : i32
    %c0_i32_1 = arith.constant 0 : i32
    return %c0_i32, %c0_i32_0 : i32, i32
  }
  func.func @transform_10(%arg0: i32) -> (i32, i32) {
    %c0_i32 = arith.constant 0 : i32
    %c0_i32_0 = arith.constant 0 : i32
    return %arg0, %c0_i32 : i32, i32
  }
  func.func @transform_11(%arg0: i32) -> (i32, i32) {
    %c0_i32 = arith.constant 0 : i32
    %c0_i32_0 = arith.constant 0 : i32
    return %arg0, %c0_i32 : i32, i32
  }
}

</mosaic_0001>

<llo_original>
// kernel: aggr_att_rnn_forward.1
$region0: #{aggr_att_rnn_forward.1}
  #allocation0 [shape = 'u32[]', space=smem, size = 0x4, offset = 0x4, fixed_abs, tag = 'smem constant byte address 0x4 - core index']
  #allocation1 [shape = 'u32[72,128]{1,0:T(1,128)}', space=vmem, size = 0x9000, scoped, tag = 'internal scratch']
  #allocation2 [shape = 'f32[8,8,64]{2,1,0:T(8,128)}', space=vmem, size = 0x8000, scoped, tag = 'scratch operand']
  %s0 = inlined_call_operand.vmem [shape: f32[8,8], index: 0, kind: input, shape index: {}]
  %s1 = inlined_call_operand.vmem [shape: f32[1,256], index: 1, kind: input, shape index: {}]
  %s2 = inlined_call_operand.vmem [shape: f32[1,256], index: 2, kind: input, shape index: {}]
  %s3 = inlined_call_operand.vmem [shape: f32[1,256], index: 3, kind: input, shape index: {}]
  %s4 = inlined_call_operand.vmem [shape: bf16[64,256], index: 4, kind: input, shape index: {}]
  %s5 = inlined_call_operand.vmem [shape: f32[8,64], index: 5, kind: input, shape index: {}]
  %s6 = inlined_call_operand.vmem [shape: f32[8,64], index: 6, kind: input, shape index: {}]
  %s7 = inlined_call_operand.vmem [shape: bf16[64,128], index: 7, kind: input, shape index: {}]
  %s8 = inlined_call_operand.vmem [shape: bf16[64,128], index: 8, kind: input, shape index: {}]
  %s9 = inlined_call_operand.vmem [shape: f32[1,128], index: 9, kind: input, shape index: {}]
  %s10 = inlined_call_operand.vmem [shape: f32[8,128], index: 10, kind: output, shape index: {0}]
  %s11 = inlined_call_operand.vmem [shape: f32[8,128], index: 11, kind: output, shape index: {1}]
  %12 = xla_tuple %s10, %s11
  %s13 = sld [smem:[#allocation0]]
  $region58: #{aggr_att_rnn_forward.1} parent=0
    _
  %s15 = ssub.s32 1, %s13
  %s16 = scalar_select 0, %s15, %s13
  // Predicated region
  $region2: #{aggr_att_rnn_forward.1} parent=0 // pred_check
    _
  $region3: #{aggr_att_rnn_forward.1} parent=0 // pred_check_branch
    %18 = sbr.rel (0) target = $region5
  $region4: #{aggr_att_rnn_forward.1} parent=0 // pred_region
    _
  $region5: #{aggr_att_rnn_forward.1} parent=0 // pred_fallthru
    _
  // Predicated region
  $region6: #{aggr_att_rnn_forward.1} parent=0 // pred_check
    _
  $region7: #{aggr_att_rnn_forward.1} parent=0 // pred_check_branch
    %20 = sbr.rel (0) target = $region9
  $region8: #{aggr_att_rnn_forward.1} parent=0 // pred_region
    _
  $region9: #{aggr_att_rnn_forward.1} parent=0 // pred_fallthru
    _
  // Predicated region
  $region10: #{aggr_att_rnn_forward.1} parent=0 // pred_check
    _
  $region11: #{aggr_att_rnn_forward.1} parent=0 // pred_check_branch
    %22 = sbr.rel (0) target = $region13
  $region12: #{aggr_att_rnn_forward.1} parent=0 // pred_region
    _
  $region13: #{aggr_att_rnn_forward.1} parent=0 // pred_fallthru
    _
  // Predicated region
  $region14: #{aggr_att_rnn_forward.1} parent=0 // pred_check
    _
  $region15: #{aggr_att_rnn_forward.1} parent=0 // pred_check_branch
    %24 = sbr.rel (0) target = $region17
  $region16: #{aggr_att_rnn_forward.1} parent=0 // pred_region
    _
  $region17: #{aggr_att_rnn_forward.1} parent=0 // pred_fallthru
    _
  // Predicated region
  $region18: #{aggr_att_rnn_forward.1} parent=0 // pred_check
    _
  $region19: #{aggr_att_rnn_forward.1} parent=0 // pred_check_branch
    %26 = sbr.rel (0) target = $region21
  $region20: #{aggr_att_rnn_forward.1} parent=0 // pred_region
    _
  $region21: #{aggr_att_rnn_forward.1} parent=0 // pred_fallthru
    _
  // Predicated region
  $region22: #{aggr_att_rnn_forward.1} parent=0 // pred_check
    _
  $region23: #{aggr_att_rnn_forward.1} parent=0 // pred_check_branch
    %28 = sbr.rel (0) target = $region25
  $region24: #{aggr_att_rnn_forward.1} parent=0 // pred_region
    _
  $region25: #{aggr_att_rnn_forward.1} parent=0 // pred_fallthru
    _
  // Predicated region
  $region26: #{aggr_att_rnn_forward.1} parent=0 // pred_check
    _
  $region27: #{aggr_att_rnn_forward.1} parent=0 // pred_check_branch
    %30 = sbr.rel (0) target = $region29
  $region28: #{aggr_att_rnn_forward.1} parent=0 // pred_region
    _
  $region29: #{aggr_att_rnn_forward.1} parent=0 // pred_fallthru
    _
  // Predicated region
  $region30: #{aggr_att_rnn_forward.1} parent=0 // pred_check
    _
  $region31: #{aggr_att_rnn_forward.1} parent=0 // pred_check_branch
    %32 = sbr.rel (0) target = $region33
  $region32: #{aggr_att_rnn_forward.1} parent=0 // pred_region
    _
  $region33: #{aggr_att_rnn_forward.1} parent=0 // pred_fallthru
    _
  // Predicated region
  $region34: #{aggr_att_rnn_forward.1} parent=0 // pred_check
    _
  $region35: #{aggr_att_rnn_forward.1} parent=0 // pred_check_branch
    %34 = sbr.rel (0) target = $region37
  $region36: #{aggr_att_rnn_forward.1} parent=0 // pred_region
    _
  $region37: #{aggr_att_rnn_forward.1} parent=0 // pred_fallthru
    _
  // Predicated region
  $region38: #{aggr_att_rnn_forward.1} parent=0 // pred_check
    _
  $region39: #{aggr_att_rnn_forward.1} parent=0 // pred_check_branch
    %36 = sbr.rel (0) target = $region41
  $region40: #{aggr_att_rnn_forward.1} parent=0 // pred_region
    _
  $region41: #{aggr_att_rnn_forward.1} parent=0 // pred_fallthru
    _
  %v38 = vld [vmem:[%s0] sm:$0xff]
  %v39 = vld [vmem:[%s1] sm:$0x3]
  %v40 = vld [vmem:[%s2] sm:$0x3]
  %v41 = vld [vmem:[%s3] sm:$0x3]
  %v42 = vld [vmem:[%s5] sm:$0xff]
  %v43 = vld [vmem:[%s6] sm:$0xff]
  %v44 = vpack.c.bf16 %v42, %v42
  %v45 = vld [vmem:[%s4] sm:$0xff]
  %v46 = vld [vmem:[%s4 + $0x8] sm:$0xff]
  %v47 = vld [vmem:[%s4 + $0x10] sm:$0xff]
  %v48 = vld [vmem:[%s4 + $0x18] sm:$0xff]
  %v49 = vld [vmem:[%s4 + $0x20] sm:$0xff]
  %v50 = vld [vmem:[%s4 + $0x28] sm:$0xff]
  %v51 = vld [vmem:[%s4 + $0x30] sm:$0xff]
  %v52 = vld [vmem:[%s4 + $0x38] sm:$0xff]
  %54 = vset.pattern.permute.xlu0 0
  %55 = vperm.xlu0 %54, %v38
  %v56 = vpop.permute.xlu0 %55
  %v59 = vperm.slane %v39, 0
  %v60 = vperm.slane %v39, 1
  %v63 = vmul.f32 %v56, %v59
  %v64 = vmul.f32 %v56, %v60
  %v73 = vunpack.c.l.b16 %v45
  %v74 = vunpack.c.h.b16 %v45
  %v75 = vunpack.c.l.b16 %v46
  %v76 = vunpack.c.h.b16 %v46
  %v77 = vunpack.c.l.b16 %v47
  %v78 = vunpack.c.h.b16 %v47
  %v79 = vunpack.c.l.b16 %v48
  %v80 = vunpack.c.h.b16 %v48
  %v81 = vunpack.c.l.b16 %v49
  %v82 = vunpack.c.h.b16 %v49
  %v83 = vunpack.c.l.b16 %v50
  %v84 = vunpack.c.h.b16 %v50
  %v85 = vunpack.c.l.b16 %v51
  %v86 = vunpack.c.h.b16 %v51
  %v87 = vunpack.c.l.b16 %v52
  %v88 = vunpack.c.h.b16 %v52
  %v89 = vpack.c.b16 %v75, %v73
  %v90 = vpack.c.b16 %v76, %v74
  %v91 = vpack.c.b16 %v79, %v77
  %v92 = vpack.c.b16 %v80, %v78
  %v93 = vpack.c.b16 %v83, %v81
  %v94 = vpack.c.b16 %v84, %v82
  %v95 = vpack.c.b16 %v87, %v85
  %v96 = vpack.c.b16 %v88, %v86
  %vm105 = vcmask 523264
  %v107 = vsel %vm105, %v44, 0
  %109 = vmatpush.bf16.msra.mxu0 0
  %110 = vmatpush.bf16.msra.mxu0 0
  %111 = vmatpush.bf16.msra.mxu0 0
  %112 = vmatpush.bf16.msra.mxu0 0
  %113 = vmatpush.bf16.msra.mxu0 %v95
  %114 = vmatpush.bf16.msra.mxu0 %v93
  %115 = vmatpush.bf16.msra.mxu0 %v91
  %116 = vmatpush.bf16.msra.mxu0 %v89
  %117 = vmatmul.bf16.gmra.mxu0 %v107
  %v118 = vpop.f32.mrf.mxu0
  %v119 = vadd.f32 %v63, %v118
  %v120 = vpop.f32.mrf.mxu0
  %121 = vdwg.mxu0
  %122 = vmatpush.bf16.msra.mxu0 0
  %123 = vmatpush.bf16.msra.mxu0 0
  %124 = vmatpush.bf16.msra.mxu0 0
  %125 = vmatpush.bf16.msra.mxu0 0
  %126 = vmatpush.bf16.msra.mxu0 %v96
  %127 = vmatpush.bf16.msra.mxu0 %v94
  %128 = vmatpush.bf16.msra.mxu0 %v92
  %129 = vmatpush.bf16.msra.mxu0 %v90
  %130 = vmatmul.bf16.gmra.mxu0 %v107
  %v131 = vpop.f32.mrf.mxu0
  %v132 = vadd.f32 %v64, %v131
  %v133 = vpop.f32.mrf.mxu0
  %134 = vdwg.mxu0
  %135 = vset.pattern.permute.xlu0 7
  %136 = vperm.xlu0 %135, %v38
  %v137 = vpop.permute.xlu0 %136
  %v140 = vperm.slane %v40, 0
  %v141 = vperm.slane %v40, 1
  %v144 = vmul.f32 %v137, %v140
  %v145 = vmul.f32 %v137, %v141
  %v146 = vadd.f32 %v119, %v144
  %v147 = vadd.f32 %v132, %v145
  %v149 = vperm.slane %v41, 0
  %v150 = vperm.slane %v41, 1
  %v153 = vadd.f32 %v146, %v149
  %v154 = vadd.f32 %v147, %v150
  %v155 = vtanh.pop %v153
  %v156 = vtanh.pop %v154
  %v157 = vadd.f32 %v155, 1.0
  %v158 = vmul.f32 %v157, 0.5
  %v159 = vadd.f32 %v156, 1.0
  %v160 = vmul.f32 %v159, 0.5
  %162 = vrot.lane.b32.xlu0 %v43, 64
  %v163 = vpop.permute.xlu0 %162
  %v165 = vmul.f32 %v158, %v163
  %v166 = vmul.f32 %v158, %v156
  %168 = vrot.lane.b32.xlu0 %v166, 64
  %v169 = vpop.permute.xlu0 %168
  %v171 = vadd.f32 %v165, %v169
  %v172 = vtanh.pop %v171
  %v173 = vmul.f32 %v160, %v172
  %175 = vrot.lane.b32.xlu0 %v173, 64
  %v176 = vpop.permute.xlu0 %175
  %178 = vst.msk [vmem:[#allocation2] sm:$0xff] %vm105, %v176
  %v179 = vpack.c.bf16 %v173, %v173
  %v180 = vld [vmem:[%s4] sm:$0xff]
  %v181 = vld [vmem:[%s4 + $0x8] sm:$0xff]
  %v182 = vld [vmem:[%s4 + $0x10] sm:$0xff]
  %v183 = vld [vmem:[%s4 + $0x18] sm:$0xff]
  %v184 = vld [vmem:[%s4 + $0x20] sm:$0xff]
  %v185 = vld [vmem:[%s4 + $0x28] sm:$0xff]
  %v186 = vld [vmem:[%s4 + $0x30] sm:$0xff]
  %v187 = vld [vmem:[%s4 + $0x38] sm:$0xff]
  %188 = vset.pattern.permute.xlu0 1
  %189 = vperm.xlu0 %188, %v38
  %v190 = vpop.permute.xlu0 %189
  %v192 = vmul.f32 %v190, %v59
  %v193 = vmul.f32 %v190, %v60
  %195 = vrot.lane.b32.xlu0 %v179, 64
  %v196 = vpop.permute.xlu0 %195
  %v205 = vunpack.c.l.b16 %v180
  %v206 = vunpack.c.h.b16 %v180
  %v207 = vunpack.c.l.b16 %v181
  %v208 = vunpack.c.h.b16 %v181
  %v209 = vunpack.c.l.b16 %v182
  %v210 = vunpack.c.h.b16 %v182
  %v211 = vunpack.c.l.b16 %v183
  %v212 = vunpack.c.h.b16 %v183
  %v213 = vunpack.c.l.b16 %v184
  %v214 = vunpack.c.h.b16 %v184
  %v215 = vunpack.c.l.b16 %v185
  %v216 = vunpack.c.h.b16 %v185
  %v217 = vunpack.c.l.b16 %v186
  %v218 = vunpack.c.h.b16 %v186
  %v219 = vunpack.c.l.b16 %v187
  %v220 = vunpack.c.h.b16 %v187
  %v221 = vpack.c.b16 %v207, %v205
  %v222 = vpack.c.b16 %v208, %v206
  %v223 = vpack.c.b16 %v211, %v209
  %v224 = vpack.c.b16 %v212, %v210
  %v225 = vpack.c.b16 %v215, %v213
  %v226 = vpack.c.b16 %v216, %v214
  %v227 = vpack.c.b16 %v219, %v217
  %v228 = vpack.c.b16 %v220, %v218
  %v238 = vsel %vm105, %v196, 0
  %240 = vmatpush.bf16.msra.mxu0 0
  %241 = vmatpush.bf16.msra.mxu0 0
  %242 = vmatpush.bf16.msra.mxu0 0
  %243 = vmatpush.bf16.msra.mxu0 0
  %244 = vmatpush.bf16.msra.mxu0 %v227
  %245 = vmatpush.bf16.msra.mxu0 %v225
  %246 = vmatpush.bf16.msra.mxu0 %v223
  %247 = vmatpush.bf16.msra.mxu0 %v221
  %248 = vmatmul.bf16.gmra.mxu0 %v238
  %v249 = vpop.f32.mrf.mxu0
  %v250 = vadd.f32 %v192, %v249
  %v251 = vpop.f32.mrf.mxu0
  %252 = vdwg.mxu0
  %253 = vmatpush.bf16.msra.mxu0 0
  %254 = vmatpush.bf16.msra.mxu0 0
  %255 = vmatpush.bf16.msra.mxu0 0
  %256 = vmatpush.bf16.msra.mxu0 0
  %257 = vmatpush.bf16.msra.mxu0 %v228
  %258 = vmatpush.bf16.msra.mxu0 %v226
  %259 = vmatpush.bf16.msra.mxu0 %v224
  %260 = vmatpush.bf16.msra.mxu0 %v222
  %261 = vmatmul.bf16.gmra.mxu0 %v238
  %v262 = vpop.f32.mrf.mxu0
  %v263 = vadd.f32 %v193, %v262
  %v264 = vpop.f32.mrf.mxu0
  %265 = vdwg.mxu0
  %266 = vset.pattern.permute.xlu0 6
  %267 = vperm.xlu0 %266, %v38
  %v268 = vpop.permute.xlu0 %267
  %v270 = vmul.f32 %v268, %v140
  %v271 = vmul.f32 %v268, %v141
  %v272 = vadd.f32 %v250, %v270
  %v273 = vadd.f32 %v263, %v271
  %v274 = vadd.f32 %v272, %v149
  %v275 = vadd.f32 %v273, %v150
  %v276 = vtanh.pop %v274
  %v277 = vtanh.pop %v275
  %v278 = vadd.f32 %v276, 1.0
  %v279 = vmul.f32 %v278, 0.5
  %v280 = vadd.f32 %v277, 1.0
  %v281 = vmul.f32 %v280, 0.5
  %v282 = vmul.f32 %v279, %v171
  %v283 = vmul.f32 %v279, %v277
  %285 = vrot.lane.b32.xlu0 %v283, 64
  %v286 = vpop.permute.xlu0 %285
  %v288 = vadd.f32 %v282, %v286
  %v289 = vtanh.pop %v288
  %v290 = vmul.f32 %v281, %v289
  %292 = vrot.lane.b32.xlu0 %v290, 64
  %v293 = vpop.permute.xlu0 %292
  %s295 = scalar_lea.vmem [#allocation2], 8
  %296 = vst.msk [vmem:[%s295] sm:$0xff] %vm105, %v293
  %v297 = vpack.c.bf16 %v290, %v290
  %v298 = vld [vmem:[%s4] sm:$0xff]
  %v299 = vld [vmem:[%s4 + $0x8] sm:$0xff]
  %v300 = vld [vmem:[%s4 + $0x10] sm:$0xff]
  %v301 = vld [vmem:[%s4 + $0x18] sm:$0xff]
  %v302 = vld [vmem:[%s4 + $0x20] sm:$0xff]
  %v303 = vld [vmem:[%s4 + $0x28] sm:$0xff]
  %v304 = vld [vmem:[%s4 + $0x30] sm:$0xff]
  %v305 = vld [vmem:[%s4 + $0x38] sm:$0xff]
  %306 = vset.pattern.permute.xlu0 2
  %307 = vperm.xlu0 %306, %v38
  %v308 = vpop.permute.xlu0 %307
  %v310 = vmul.f32 %v308, %v59
  %v311 = vmul.f32 %v308, %v60
  %313 = vrot.lane.b32.xlu0 %v297, 64
  %v314 = vpop.permute.xlu0 %313
  %v323 = vunpack.c.l.b16 %v298
  %v324 = vunpack.c.h.b16 %v298
  %v325 = vunpack.c.l.b16 %v299
  %v326 = vunpack.c.h.b16 %v299
  %v327 = vunpack.c.l.b16 %v300
  %v328 = vunpack.c.h.b16 %v300
  %v329 = vunpack.c.l.b16 %v301
  %v330 = vunpack.c.h.b16 %v301
  %v331 = vunpack.c.l.b16 %v302
  %v332 = vunpack.c.h.b16 %v302
  %v333 = vunpack.c.l.b16 %v303
  %v334 = vunpack.c.h.b16 %v303
  %v335 = vunpack.c.l.b16 %v304
  %v336 = vunpack.c.h.b16 %v304
  %v337 = vunpack.c.l.b16 %v305
  %v338 = vunpack.c.h.b16 %v305
  %v339 = vpack.c.b16 %v325, %v323
  %v340 = vpack.c.b16 %v326, %v324
  %v341 = vpack.c.b16 %v329, %v327
  %v342 = vpack.c.b16 %v330, %v328
  %v343 = vpack.c.b16 %v333, %v331
  %v344 = vpack.c.b16 %v334, %v332
  %v345 = vpack.c.b16 %v337, %v335
  %v346 = vpack.c.b16 %v338, %v336
  %v356 = vsel %vm105, %v314, 0
  %358 = vmatpush.bf16.msra.mxu0 0
  %359 = vmatpush.bf16.msra.mxu0 0
  %360 = vmatpush.bf16.msra.mxu0 0
  %361 = vmatpush.bf16.msra.mxu0 0
  %362 = vmatpush.bf16.msra.mxu0 %v345
  %363 = vmatpush.bf16.msra.mxu0 %v343
  %364 = vmatpush.bf16.msra.mxu0 %v341
  %365 = vmatpush.bf16.msra.mxu0 %v339
  %366 = vmatmul.bf16.gmra.mxu0 %v356
  %v367 = vpop.f32.mrf.mxu0
  %v368 = vadd.f32 %v310, %v367
  %v369 = vpop.f32.mrf.mxu0
  %370 = vdwg.mxu0
  %371 = vmatpush.bf16.msra.mxu0 0
  %372 = vmatpush.bf16.msra.mxu0 0
  %373 = vmatpush.bf16.msra.mxu0 0
  %374 = vmatpush.bf16.msra.mxu0 0
  %375 = vmatpush.bf16.msra.mxu0 %v346
  %376 = vmatpush.bf16.msra.mxu0 %v344
  %377 = vmatpush.bf16.msra.mxu0 %v342
  %378 = vmatpush.bf16.msra.mxu0 %v340
  %379 = vmatmul.bf16.gmra.mxu0 %v356
  %v380 = vpop.f32.mrf.mxu0
  %v381 = vadd.f32 %v311, %v380
  %v382 = vpop.f32.mrf.mxu0
  %383 = vdwg.mxu0
  %384 = vset.pattern.permute.xlu0 5
  %385 = vperm.xlu0 %384, %v38
  %v386 = vpop.permute.xlu0 %385
  %v388 = vmul.f32 %v386, %v140
  %v389 = vmul.f32 %v386, %v141
  %v390 = vadd.f32 %v368, %v388
  %v391 = vadd.f32 %v381, %v389
  %v392 = vadd.f32 %v390, %v149
  %v393 = vadd.f32 %v391, %v150
  %v394 = vtanh.pop %v392
  %v395 = vtanh.pop %v393
  %v396 = vadd.f32 %v394, 1.0
  %v397 = vmul.f32 %v396, 0.5
  %v398 = vadd.f32 %v395, 1.0
  %v399 = vmul.f32 %v398, 0.5
  %v400 = vmul.f32 %v397, %v288
  %v401 = vmul.f32 %v397, %v395
  %403 = vrot.lane.b32.xlu0 %v401, 64
  %v404 = vpop.permute.xlu0 %403
  %v406 = vadd.f32 %v400, %v404
  %v407 = vtanh.pop %v406
  %v408 = vmul.f32 %v399, %v407
  %410 = vrot.lane.b32.xlu0 %v408, 64
  %v411 = vpop.permute.xlu0 %410
  %s413 = scalar_lea.vmem [#allocation2], 16
  %414 = vst.msk [vmem:[%s413] sm:$0xff] %vm105, %v411
  %v415 = vpack.c.bf16 %v408, %v408
  %v416 = vld [vmem:[%s4] sm:$0xff]
  %v417 = vld [vmem:[%s4 + $0x8] sm:$0xff]
  %v418 = vld [vmem:[%s4 + $0x10] sm:$0xff]
  %v419 = vld [vmem:[%s4 + $0x18] sm:$0xff]
  %v420 = vld [vmem:[%s4 + $0x20] sm:$0xff]
  %v421 = vld [vmem:[%s4 + $0x28] sm:$0xff]
  %v422 = vld [vmem:[%s4 + $0x30] sm:$0xff]
  %v423 = vld [vmem:[%s4 + $0x38] sm:$0xff]
  %424 = vset.pattern.permute.xlu0 3
  %425 = vperm.xlu0 %424, %v38
  %v426 = vpop.permute.xlu0 %425
  %v428 = vmul.f32 %v426, %v59
  %v429 = vmul.f32 %v426, %v60
  %431 = vrot.lane.b32.xlu0 %v415, 64
  %v432 = vpop.permute.xlu0 %431
  %v441 = vunpack.c.l.b16 %v416
  %v442 = vunpack.c.h.b16 %v416
  %v443 = vunpack.c.l.b16 %v417
  %v444 = vunpack.c.h.b16 %v417
  %v445 = vunpack.c.l.b16 %v418
  %v446 = vunpack.c.h.b16 %v418
  %v447 = vunpack.c.l.b16 %v419
  %v448 = vunpack.c.h.b16 %v419
  %v449 = vunpack.c.l.b16 %v420
  %v450 = vunpack.c.h.b16 %v420
  %v451 = vunpack.c.l.b16 %v421
  %v452 = vunpack.c.h.b16 %v421
  %v453 = vunpack.c.l.b16 %v422
  %v454 = vunpack.c.h.b16 %v422
  %v455 = vunpack.c.l.b16 %v423
  %v456 = vunpack.c.h.b16 %v423
  %v457 = vpack.c.b16 %v443, %v441
  %v458 = vpack.c.b16 %v444, %v442
  %v459 = vpack.c.b16 %v447, %v445
  %v460 = vpack.c.b16 %v448, %v446
  %v461 = vpack.c.b16 %v451, %v449
  %v462 = vpack.c.b16 %v452, %v450
  %v463 = vpack.c.b16 %v455, %v453
  %v464 = vpack.c.b16 %v456, %v454
  %v474 = vsel %vm105, %v432, 0
  %476 = vmatpush.bf16.msra.mxu0 0
  %477 = vmatpush.bf16.msra.mxu0 0
  %478 = vmatpush.bf16.msra.mxu0 0
  %479 = vmatpush.bf16.msra.mxu0 0
  %480 = vmatpush.bf16.msra.mxu0 %v463
  %481 = vmatpush.bf16.msra.mxu0 %v461
  %482 = vmatpush.bf16.msra.mxu0 %v459
  %483 = vmatpush.bf16.msra.mxu0 %v457
  %484 = vmatmul.bf16.gmra.mxu0 %v474
  %v485 = vpop.f32.mrf.mxu0
  %v486 = vadd.f32 %v428, %v485
  %v487 = vpop.f32.mrf.mxu0
  %488 = vdwg.mxu0
  %489 = vmatpush.bf16.msra.mxu0 0
  %490 = vmatpush.bf16.msra.mxu0 0
  %491 = vmatpush.bf16.msra.mxu0 0
  %492 = vmatpush.bf16.msra.mxu0 0
  %493 = vmatpush.bf16.msra.mxu0 %v464
  %494 = vmatpush.bf16.msra.mxu0 %v462
  %495 = vmatpush.bf16.msra.mxu0 %v460
  %496 = vmatpush.bf16.msra.mxu0 %v458
  %497 = vmatmul.bf16.gmra.mxu0 %v474
  %v498 = vpop.f32.mrf.mxu0
  %v499 = vadd.f32 %v429, %v498
  %v500 = vpop.f32.mrf.mxu0
  %501 = vdwg.mxu0
  %502 = vset.pattern.permute.xlu0 4
  %503 = vperm.xlu0 %502, %v38
  %v504 = vpop.permute.xlu0 %503
  %v506 = vmul.f32 %v504, %v140
  %v507 = vmul.f32 %v504, %v141
  %v508 = vadd.f32 %v486, %v506
  %v509 = vadd.f32 %v499, %v507
  %v510 = vadd.f32 %v508, %v149
  %v511 = vadd.f32 %v509, %v150
  %v512 = vtanh.pop %v510
  %v513 = vtanh.pop %v511
  %v514 = vadd.f32 %v512, 1.0
  %v515 = vmul.f32 %v514, 0.5
  %v516 = vadd.f32 %v513, 1.0
  %v517 = vmul.f32 %v516, 0.5
  %v518 = vmul.f32 %v515, %v406
  %v519 = vmul.f32 %v515, %v513
  %521 = vrot.lane.b32.xlu0 %v519, 64
  %v522 = vpop.permute.xlu0 %521
  %v524 = vadd.f32 %v518, %v522
  %v525 = vtanh.pop %v524
  %v526 = vmul.f32 %v517, %v525
  %528 = vrot.lane.b32.xlu0 %v526, 64
  %v529 = vpop.permute.xlu0 %528
  %s531 = scalar_lea.vmem [#allocation2], 24
  %532 = vst.msk [vmem:[%s531] sm:$0xff] %vm105, %v529
  %v533 = vpack.c.bf16 %v526, %v526
  %v534 = vld [vmem:[%s4] sm:$0xff]
  %v535 = vld [vmem:[%s4 + $0x8] sm:$0xff]
  %v536 = vld [vmem:[%s4 + $0x10] sm:$0xff]
  %v537 = vld [vmem:[%s4 + $0x18] sm:$0xff]
  %v538 = vld [vmem:[%s4 + $0x20] sm:$0xff]
  %v539 = vld [vmem:[%s4 + $0x28] sm:$0xff]
  %v540 = vld [vmem:[%s4 + $0x30] sm:$0xff]
  %v541 = vld [vmem:[%s4 + $0x38] sm:$0xff]
  %v542 = vmul.f32 %v504, %v59
  %v543 = vmul.f32 %v504, %v60
  %545 = vrot.lane.b32.xlu0 %v533, 64
  %v546 = vpop.permute.xlu0 %545
  %v555 = vunpack.c.l.b16 %v534
  %v556 = vunpack.c.h.b16 %v534
  %v557 = vunpack.c.l.b16 %v535
  %v558 = vunpack.c.h.b16 %v535
  %v559 = vunpack.c.l.b16 %v536
  %v560 = vunpack.c.h.b16 %v536
  %v561 = vunpack.c.l.b16 %v537
  %v562 = vunpack.c.h.b16 %v537
  %v563 = vunpack.c.l.b16 %v538
  %v564 = vunpack.c.h.b16 %v538
  %v565 = vunpack.c.l.b16 %v539
  %v566 = vunpack.c.h.b16 %v539
  %v567 = vunpack.c.l.b16 %v540
  %v568 = vunpack.c.h.b16 %v540
  %v569 = vunpack.c.l.b16 %v541
  %v570 = vunpack.c.h.b16 %v541
  %v571 = vpack.c.b16 %v557, %v555
  %v572 = vpack.c.b16 %v558, %v556
  %v573 = vpack.c.b16 %v561, %v559
  %v574 = vpack.c.b16 %v562, %v560
  %v575 = vpack.c.b16 %v565, %v563
  %v576 = vpack.c.b16 %v566, %v564
  %v577 = vpack.c.b16 %v569, %v567
  %v578 = vpack.c.b16 %v570, %v568
  %v588 = vsel %vm105, %v546, 0
  %590 = vmatpush.bf16.msra.mxu0 0
  %591 = vmatpush.bf16.msra.mxu0 0
  %592 = vmatpush.bf16.msra.mxu0 0
  %593 = vmatpush.bf16.msra.mxu0 0
  %594 = vmatpush.bf16.msra.mxu0 %v577
  %595 = vmatpush.bf16.msra.mxu0 %v575
  %596 = vmatpush.bf16.msra.mxu0 %v573
  %597 = vmatpush.bf16.msra.mxu0 %v571
  %598 = vmatmul.bf16.gmra.mxu0 %v588
  %v599 = vpop.f32.mrf.mxu0
  %v600 = vadd.f32 %v542, %v599
  %v601 = vpop.f32.mrf.mxu0
  %602 = vdwg.mxu0
  %603 = vmatpush.bf16.msra.mxu0 0
  %604 = vmatpush.bf16.msra.mxu0 0
  %605 = vmatpush.bf16.msra.mxu0 0
  %606 = vmatpush.bf16.msra.mxu0 0
  %607 = vmatpush.bf16.msra.mxu0 %v578
  %608 = vmatpush.bf16.msra.mxu0 %v576
  %609 = vmatpush.bf16.msra.mxu0 %v574
  %610 = vmatpush.bf16.msra.mxu0 %v572
  %611 = vmatmul.bf16.gmra.mxu0 %v588
  %v612 = vpop.f32.mrf.mxu0
  %v613 = vadd.f32 %v543, %v612
  %v614 = vpop.f32.mrf.mxu0
  %615 = vdwg.mxu0
  %v616 = vmul.f32 %v426, %v140
  %v617 = vmul.f32 %v426, %v141
  %v618 = vadd.f32 %v600, %v616
  %v619 = vadd.f32 %v613, %v617
  %v620 = vadd.f32 %v618, %v149
  %v621 = vadd.f32 %v619, %v150
  %v622 = vtanh.pop %v620
  %v623 = vtanh.pop %v621
  %v624 = vadd.f32 %v622, 1.0
  %v625 = vmul.f32 %v624, 0.5
  %v626 = vadd.f32 %v623, 1.0
  %v627 = vmul.f32 %v626, 0.5
  %v628 = vmul.f32 %v625, %v524
  %v629 = vmul.f32 %v625, %v623
  %631 = vrot.lane.b32.xlu0 %v629, 64
  %v632 = vpop.permute.xlu0 %631
  %v634 = vadd.f32 %v628, %v632
  %v635 = vtanh.pop %v634
  %v636 = vmul.f32 %v627, %v635
  %638 = vrot.lane.b32.xlu0 %v636, 64
  %v639 = vpop.permute.xlu0 %638
  %s641 = scalar_lea.vmem [#allocation2], 32
  %642 = vst.msk [vmem:[%s641] sm:$0xff] %vm105, %v639
  %v643 = vpack.c.bf16 %v636, %v636
  %v644 = vld [vmem:[%s4] sm:$0xff]
  %v645 = vld [vmem:[%s4 + $0x8] sm:$0xff]
  %v646 = vld [vmem:[%s4 + $0x10] sm:$0xff]
  %v647 = vld [vmem:[%s4 + $0x18] sm:$0xff]
  %v648 = vld [vmem:[%s4 + $0x20] sm:$0xff]
  %v649 = vld [vmem:[%s4 + $0x28] sm:$0xff]
  %v650 = vld [vmem:[%s4 + $0x30] sm:$0xff]
  %v651 = vld [vmem:[%s4 + $0x38] sm:$0xff]
  %v652 = vmul.f32 %v386, %v59
  %v653 = vmul.f32 %v386, %v60
  %655 = vrot.lane.b32.xlu0 %v643, 64
  %v656 = vpop.permute.xlu0 %655
  %v665 = vunpack.c.l.b16 %v644
  %v666 = vunpack.c.h.b16 %v644
  %v667 = vunpack.c.l.b16 %v645
  %v668 = vunpack.c.h.b16 %v645
  %v669 = vunpack.c.l.b16 %v646
  %v670 = vunpack.c.h.b16 %v646
  %v671 = vunpack.c.l.b16 %v647
  %v672 = vunpack.c.h.b16 %v647
  %v673 = vunpack.c.l.b16 %v648
  %v674 = vunpack.c.h.b16 %v648
  %v675 = vunpack.c.l.b16 %v649
  %v676 = vunpack.c.h.b16 %v649
  %v677 = vunpack.c.l.b16 %v650
  %v678 = vunpack.c.h.b16 %v650
  %v679 = vunpack.c.l.b16 %v651
  %v680 = vunpack.c.h.b16 %v651
  %v681 = vpack.c.b16 %v667, %v665
  %v682 = vpack.c.b16 %v668, %v666
  %v683 = vpack.c.b16 %v671, %v669
  %v684 = vpack.c.b16 %v672, %v670
  %v685 = vpack.c.b16 %v675, %v673
  %v686 = vpack.c.b16 %v676, %v674
  %v687 = vpack.c.b16 %v679, %v677
  %v688 = vpack.c.b16 %v680, %v678
  %v698 = vsel %vm105, %v656, 0
  %700 = vmatpush.bf16.msra.mxu0 0
  %701 = vmatpush.bf16.msra.mxu0 0
  %702 = vmatpush.bf16.msra.mxu0 0
  %703 = vmatpush.bf16.msra.mxu0 0
  %704 = vmatpush.bf16.msra.mxu0 %v687
  %705 = vmatpush.bf16.msra.mxu0 %v685
  %706 = vmatpush.bf16.msra.mxu0 %v683
  %707 = vmatpush.bf16.msra.mxu0 %v681
  %708 = vmatmul.bf16.gmra.mxu0 %v698
  %v709 = vpop.f32.mrf.mxu0
  %v710 = vadd.f32 %v652, %v709
  %v711 = vpop.f32.mrf.mxu0
  %712 = vdwg.mxu0
  %713 = vmatpush.bf16.msra.mxu0 0
  %714 = vmatpush.bf16.msra.mxu0 0
  %715 = vmatpush.bf16.msra.mxu0 0
  %716 = vmatpush.bf16.msra.mxu0 0
  %717 = vmatpush.bf16.msra.mxu0 %v688
  %718 = vmatpush.bf16.msra.mxu0 %v686
  %719 = vmatpush.bf16.msra.mxu0 %v684
  %720 = vmatpush.bf16.msra.mxu0 %v682
  %721 = vmatmul.bf16.gmra.mxu0 %v698
  %v722 = vpop.f32.mrf.mxu0
  %v723 = vadd.f32 %v653, %v722
  %v724 = vpop.f32.mrf.mxu0
  %725 = vdwg.mxu0
  %v726 = vmul.f32 %v308, %v140
  %v727 = vmul.f32 %v308, %v141
  %v728 = vadd.f32 %v710, %v726
  %v729 = vadd.f32 %v723, %v727
  %v730 = vadd.f32 %v728, %v149
  %v731 = vadd.f32 %v729, %v150
  %v732 = vtanh.pop %v730
  %v733 = vtanh.pop %v731
  %v734 = vadd.f32 %v732, 1.0
  %v735 = vmul.f32 %v734, 0.5
  %v736 = vadd.f32 %v733, 1.0
  %v737 = vmul.f32 %v736, 0.5
  %v738 = vmul.f32 %v735, %v634
  %v739 = vmul.f32 %v735, %v733
  %741 = vrot.lane.b32.xlu0 %v739, 64
  %v742 = vpop.permute.xlu0 %741
  %v744 = vadd.f32 %v738, %v742
  %v745 = vtanh.pop %v744
  %v746 = vmul.f32 %v737, %v745
  %748 = vrot.lane.b32.xlu0 %v746, 64
  %v749 = vpop.permute.xlu0 %748
  %s751 = scalar_lea.vmem [#allocation2], 40
  %752 = vst.msk [vmem:[%s751] sm:$0xff] %vm105, %v749
  %v753 = vpack.c.bf16 %v746, %v746
  %v754 = vld [vmem:[%s4] sm:$0xff]
  %v755 = vld [vmem:[%s4 + $0x8] sm:$0xff]
  %v756 = vld [vmem:[%s4 + $0x10] sm:$0xff]
  %v757 = vld [vmem:[%s4 + $0x18] sm:$0xff]
  %v758 = vld [vmem:[%s4 + $0x20] sm:$0xff]
  %v759 = vld [vmem:[%s4 + $0x28] sm:$0xff]
  %v760 = vld [vmem:[%s4 + $0x30] sm:$0xff]
  %v761 = vld [vmem:[%s4 + $0x38] sm:$0xff]
  %v762 = vmul.f32 %v268, %v59
  %v763 = vmul.f32 %v268, %v60
  %765 = vrot.lane.b32.xlu0 %v753, 64
  %v766 = vpop.permute.xlu0 %765
  %v775 = vunpack.c.l.b16 %v754
  %v776 = vunpack.c.h.b16 %v754
  %v777 = vunpack.c.l.b16 %v755
  %v778 = vunpack.c.h.b16 %v755
  %v779 = vunpack.c.l.b16 %v756
  %v780 = vunpack.c.h.b16 %v756
  %v781 = vunpack.c.l.b16 %v757
  %v782 = vunpack.c.h.b16 %v757
  %v783 = vunpack.c.l.b16 %v758
  %v784 = vunpack.c.h.b16 %v758
  %v785 = vunpack.c.l.b16 %v759
  %v786 = vunpack.c.h.b16 %v759
  %v787 = vunpack.c.l.b16 %v760
  %v788 = vunpack.c.h.b16 %v760
  %v789 = vunpack.c.l.b16 %v761
  %v790 = vunpack.c.h.b16 %v761
  %v791 = vpack.c.b16 %v777, %v775
  %v792 = vpack.c.b16 %v778, %v776
  %v793 = vpack.c.b16 %v781, %v779
  %v794 = vpack.c.b16 %v782, %v780
  %v795 = vpack.c.b16 %v785, %v783
  %v796 = vpack.c.b16 %v786, %v784
  %v797 = vpack.c.b16 %v789, %v787
  %v798 = vpack.c.b16 %v790, %v788
  %v808 = vsel %vm105, %v766, 0
  %810 = vmatpush.bf16.msra.mxu0 0
  %811 = vmatpush.bf16.msra.mxu0 0
  %812 = vmatpush.bf16.msra.mxu0 0
  %813 = vmatpush.bf16.msra.mxu0 0
  %814 = vmatpush.bf16.msra.mxu0 %v797
  %815 = vmatpush.bf16.msra.mxu0 %v795
  %816 = vmatpush.bf16.msra.mxu0 %v793
  %817 = vmatpush.bf16.msra.mxu0 %v791
  %818 = vmatmul.bf16.gmra.mxu0 %v808
  %v819 = vpop.f32.mrf.mxu0
  %v820 = vadd.f32 %v762, %v819
  %v821 = vpop.f32.mrf.mxu0
  %822 = vdwg.mxu0
  %823 = vmatpush.bf16.msra.mxu0 0
  %824 = vmatpush.bf16.msra.mxu0 0
  %825 = vmatpush.bf16.msra.mxu0 0
  %826 = vmatpush.bf16.msra.mxu0 0
  %827 = vmatpush.bf16.msra.mxu0 %v798
  %828 = vmatpush.bf16.msra.mxu0 %v796
  %829 = vmatpush.bf16.msra.mxu0 %v794
  %830 = vmatpush.bf16.msra.mxu0 %v792
  %831 = vmatmul.bf16.gmra.mxu0 %v808
  %v832 = vpop.f32.mrf.mxu0
  %v833 = vadd.f32 %v763, %v832
  %v834 = vpop.f32.mrf.mxu0
  %835 = vdwg.mxu0
  %v836 = vmul.f32 %v190, %v140
  %v837 = vmul.f32 %v190, %v141
  %v838 = vadd.f32 %v820, %v836
  %v839 = vadd.f32 %v833, %v837
  %v840 = vadd.f32 %v838, %v149
  %v841 = vadd.f32 %v839, %v150
  %v842 = vtanh.pop %v840
  %v843 = vtanh.pop %v841
  %v844 = vadd.f32 %v842, 1.0
  %v845 = vmul.f32 %v844, 0.5
  %v846 = vadd.f32 %v843, 1.0
  %v847 = vmul.f32 %v846, 0.5
  %v848 = vmul.f32 %v845, %v744
  %v849 = vmul.f32 %v845, %v843
  %851 = vrot.lane.b32.xlu0 %v849, 64
  %v852 = vpop.permute.xlu0 %851
  %v854 = vadd.f32 %v848, %v852
  %v855 = vtanh.pop %v854
  %v856 = vmul.f32 %v847, %v855
  %858 = vrot.lane.b32.xlu0 %v856, 64
  %v859 = vpop.permute.xlu0 %858
  %s861 = scalar_lea.vmem [#allocation2], 48
  %862 = vst.msk [vmem:[%s861] sm:$0xff] %vm105, %v859
  %v863 = vpack.c.bf16 %v856, %v856
  %v864 = vld [vmem:[%s4] sm:$0xff]
  %v865 = vld [vmem:[%s4 + $0x8] sm:$0xff]
  %v866 = vld [vmem:[%s4 + $0x10] sm:$0xff]
  %v867 = vld [vmem:[%s4 + $0x18] sm:$0xff]
  %v868 = vld [vmem:[%s4 + $0x20] sm:$0xff]
  %v869 = vld [vmem:[%s4 + $0x28] sm:$0xff]
  %v870 = vld [vmem:[%s4 + $0x30] sm:$0xff]
  %v871 = vld [vmem:[%s4 + $0x38] sm:$0xff]
  %v872 = vmul.f32 %v137, %v59
  %v873 = vmul.f32 %v137, %v60
  %875 = vrot.lane.b32.xlu0 %v863, 64
  %v876 = vpop.permute.xlu0 %875
  %v885 = vunpack.c.l.b16 %v864
  %v886 = vunpack.c.h.b16 %v864
  %v887 = vunpack.c.l.b16 %v865
  %v888 = vunpack.c.h.b16 %v865
  %v889 = vunpack.c.l.b16 %v866
  %v890 = vunpack.c.h.b16 %v866
  %v891 = vunpack.c.l.b16 %v867
  %v892 = vunpack.c.h.b16 %v867
  %v893 = vunpack.c.l.b16 %v868
  %v894 = vunpack.c.h.b16 %v868
  %v895 = vunpack.c.l.b16 %v869
  %v896 = vunpack.c.h.b16 %v869
  %v897 = vunpack.c.l.b16 %v870
  %v898 = vunpack.c.h.b16 %v870
  %v899 = vunpack.c.l.b16 %v871
  %v900 = vunpack.c.h.b16 %v871
  %v901 = vpack.c.b16 %v887, %v885
  %v902 = vpack.c.b16 %v888, %v886
  %v903 = vpack.c.b16 %v891, %v889
  %v904 = vpack.c.b16 %v892, %v890
  %v905 = vpack.c.b16 %v895, %v893
  %v906 = vpack.c.b16 %v896, %v894
  %v907 = vpack.c.b16 %v899, %v897
  %v908 = vpack.c.b16 %v900, %v898
  %v918 = vsel %vm105, %v876, 0
  %920 = vmatpush.bf16.msra.mxu0 0
  %921 = vmatpush.bf16.msra.mxu0 0
  %922 = vmatpush.bf16.msra.mxu0 0
  %923 = vmatpush.bf16.msra.mxu0 0
  %924 = vmatpush.bf16.msra.mxu0 %v907
  %925 = vmatpush.bf16.msra.mxu0 %v905
  %926 = vmatpush.bf16.msra.mxu0 %v903
  %927 = vmatpush.bf16.msra.mxu0 %v901
  %928 = vmatmul.bf16.gmra.mxu0 %v918
  %v929 = vpop.f32.mrf.mxu0
  %v930 = vadd.f32 %v872, %v929
  %v931 = vpop.f32.mrf.mxu0
  %932 = vdwg.mxu0
  %933 = vmatpush.bf16.msra.mxu0 0
  %934 = vmatpush.bf16.msra.mxu0 0
  %935 = vmatpush.bf16.msra.mxu0 0
  %936 = vmatpush.bf16.msra.mxu0 0
  %937 = vmatpush.bf16.msra.mxu0 %v908
  %938 = vmatpush.bf16.msra.mxu0 %v906
  %939 = vmatpush.bf16.msra.mxu0 %v904
  %940 = vmatpush.bf16.msra.mxu0 %v902
  %941 = vmatmul.bf16.gmra.mxu0 %v918
  %v942 = vpop.f32.mrf.mxu0
  %v943 = vadd.f32 %v873, %v942
  %v944 = vpop.f32.mrf.mxu0
  %945 = vdwg.mxu0
  %v946 = vmul.f32 %v56, %v140
  %v947 = vmul.f32 %v56, %v141
  %v948 = vadd.f32 %v930, %v946
  %v949 = vadd.f32 %v943, %v947
  %v950 = vadd.f32 %v948, %v149
  %v951 = vadd.f32 %v949, %v150
  %v952 = vtanh.pop %v950
  %v953 = vtanh.pop %v951
  %v954 = vadd.f32 %v952, 1.0
  %v955 = vmul.f32 %v954, 0.5
  %v956 = vadd.f32 %v953, 1.0
  %v957 = vmul.f32 %v956, 0.5
  %v958 = vmul.f32 %v955, %v854
  %v959 = vmul.f32 %v955, %v953
  %961 = vrot.lane.b32.xlu0 %v959, 64
  %v962 = vpop.permute.xlu0 %961
  %v964 = vadd.f32 %v958, %v962
  %v965 = vtanh.pop %v964
  %v966 = vmul.f32 %v957, %v965
  %968 = vrot.lane.b32.xlu0 %v966, 64
  %v969 = vpop.permute.xlu0 %968
  %s971 = scalar_lea.vmem [#allocation2], 56
  %972 = vst.msk [vmem:[%s971] sm:$0xff] %vm105, %v969
  %v973 = vlaneseq
  %v974 = vand.u32 %v973, 127
  %vm975 = vcmp.lt.s32.totalorder %v974, 32
  %v976 = vsel %vm975, 1, 0
  %vm977 = vcmp.eq.s32.totalorder %v976, 1
  %v978 = vsel %vm977, %v969, 0.0
  %v979 = vsel %vm977, 0.0, %v969
  %v980 = vld [vmem:[#allocation2] sm:$0xff]
  %v981 = vmul.f32 %v980, %v978
  %v982 = vld [vmem:[%s971] sm:$0xff]
  %v983 = vmul.f32 %v982, %v979
  %v984 = vadd.f32 %v981, %v983
  %v985 = vsel %vm105, %v984, 0.0
  %986 = vadd.xlane.f32.xlu0 %v985
  %v987 = vpop.xlane.xlu0 %986
  %v988 = vmul.f32 %v987, 0.125
  %vm989 = vcmp.eq.s32.totalorder %v974, 0
  %v990 = vsel %vm989, 1, 0
  %vm991 = vcmp.eq.s32.totalorder %v990, 1
  %v992 = vsel %vm991, %v988, 0.0
  %v993 = vadd.f32 %v992, 0.0
  %v994 = vld [vmem:[%s295] sm:$0xff]
  %v995 = vmul.f32 %v994, %v978
  %v996 = vld [vmem:[%s861] sm:$0xff]
  %v997 = vmul.f32 %v996, %v979
  %v998 = vadd.f32 %v995, %v997
  %v999 = vsel %vm105, %v998, 0.0
  %1000 = vadd.xlane.f32.xlu0 %v999
  %v1001 = vpop.xlane.xlu0 %1000
  %v1002 = vmul.f32 %v1001, 0.125
  %vm1003 = vcmp.eq.s32.totalorder %v974, 1
  %v1004 = vsel %vm1003, 1, 0
  %vm1005 = vcmp.eq.s32.totalorder %v1004, 1
  %v1006 = vsel %vm1005, %v1002, 0.0
  %v1007 = vadd.f32 %v993, %v1006
  %v1008 = vld [vmem:[%s413] sm:$0xff]
  %v1009 = vmul.f32 %v1008, %v978
  %v1010 = vld [vmem:[%s751] sm:$0xff]
  %v1011 = vmul.f32 %v1010, %v979
  %v1012 = vadd.f32 %v1009, %v1011
  %v1013 = vsel %vm105, %v1012, 0.0
  %1014 = vadd.xlane.f32.xlu0 %v1013
  %v1015 = vpop.xlane.xlu0 %1014
  %v1016 = vmul.f32 %v1015, 0.125
  %vm1017 = vcmp.eq.s32.totalorder %v974, 2
  %v1018 = vsel %vm1017, 1, 0
  %vm1019 = vcmp.eq.s32.totalorder %v1018, 1
  %v1020 = vsel %vm1019, %v1016, 0.0
  %v1021 = vadd.f32 %v1007, %v1020
  %v1022 = vld [vmem:[%s531] sm:$0xff]
  %v1023 = vmul.f32 %v1022, %v978
  %v1024 = vld [vmem:[%s641] sm:$0xff]
  %v1025 = vmul.f32 %v1024, %v979
  %v1026 = vadd.f32 %v1023, %v1025
  %v1027 = vsel %vm105, %v1026, 0.0
  %1028 = vadd.xlane.f32.xlu0 %v1027
  %v1029 = vpop.xlane.xlu0 %1028
  %v1030 = vmul.f32 %v1029, 0.125
  %vm1031 = vcmp.eq.s32.totalorder %v974, 3
  %v1032 = vsel %vm1031, 1, 0
  %vm1033 = vcmp.eq.s32.totalorder %v1032, 1
  %v1034 = vsel %vm1033, %v1030, 0.0
  %v1035 = vadd.f32 %v1021, %v1034
  %v1036 = vmul.f32 %v1024, %v978
  %v1037 = vmul.f32 %v1022, %v979
  %v1038 = vadd.f32 %v1036, %v1037
  %v1039 = vsel %vm105, %v1038, 0.0
  %1040 = vadd.xlane.f32.xlu0 %v1039
  %v1041 = vpop.xlane.xlu0 %1040
  %v1042 = vmul.f32 %v1041, 0.125
  %vm1043 = vcmp.eq.s32.totalorder %v974, 4
  %v1044 = vsel %vm1043, 1, 0
  %vm1045 = vcmp.eq.s32.totalorder %v1044, 1
  %v1046 = vsel %vm1045, %v1042, 0.0
  %v1047 = vadd.f32 %v1035, %v1046
  %v1048 = vmul.f32 %v1010, %v978
  %v1049 = vmul.f32 %v1008, %v979
  %v1050 = vadd.f32 %v1048, %v1049
  %v1051 = vsel %vm105, %v1050, 0.0
  %1052 = vadd.xlane.f32.xlu0 %v1051
  %v1053 = vpop.xlane.xlu0 %1052
  %v1054 = vmul.f32 %v1053, 0.125
  %vm1055 = vcmp.eq.s32.totalorder %v974, 5
  %v1056 = vsel %vm1055, 1, 0
  %vm1057 = vcmp.eq.s32.totalorder %v1056, 1
  %v1058 = vsel %vm1057, %v1054, 0.0
  %v1059 = vadd.f32 %v1047, %v1058
  %v1060 = vmul.f32 %v996, %v978
  %v1061 = vmul.f32 %v994, %v979
  %v1062 = vadd.f32 %v1060, %v1061
  %v1063 = vsel %vm105, %v1062, 0.0
  %1064 = vadd.xlane.f32.xlu0 %v1063
  %v1065 = vpop.xlane.xlu0 %1064
  %v1066 = vmul.f32 %v1065, 0.125
  %vm1067 = vcmp.eq.s32.totalorder %v974, 6
  %v1068 = vsel %vm1067, 1, 0
  %vm1069 = vcmp.eq.s32.totalorder %v1068, 1
  %v1070 = vsel %vm1069, %v1066, 0.0
  %v1071 = vadd.f32 %v1059, %v1070
  %v1072 = vmul.f32 %v982, %v978
  %v1073 = vmul.f32 %v980, %v979
  %v1074 = vadd.f32 %v1072, %v1073
  %v1075 = vsel %vm105, %v1074, 0.0
  %1076 = vadd.xlane.f32.xlu0 %v1075
  %v1077 = vpop.xlane.xlu0 %1076
  %v1078 = vmul.f32 %v1077, 0.125
  %vm1079 = vcmp.eq.s32.totalorder %v974, 7
  %v1080 = vsel %vm1079, 1, 0
  %vm1081 = vcmp.eq.s32.totalorder %v1080, 1
  %v1082 = vsel %vm1081, %v1078, 0.0
  %v1083 = vadd.f32 %v1071, %v1082
  %vm1084 = vcmask 64512
  %v1085 = vsel %vm1084, %v1083, -inf
  %1086 = vmax.xlane.f32.xlu0 %v1085
  %v1087 = vpop.xlane.xlu0 %1086
  %v1088 = vsub.f32 %v1083, %v1087
  %v1089 = vmul.f32 %v1088, 1.442695
  %v1090 = vpow.pop %v1089
  %v1091 = vsel %vm1084, %v1090, 0.0
  %1092 = vadd.xlane.f32.xlu0 %v1091
  %v1093 = vpop.xlane.xlu0 %1092
  %v1094 = vrcp.pop %v1093
  %v1095 = vmul.f32 %v1090, %v1094
  %1097 = vset.pattern.permute.xlu0 0
  %1098 = vperm.xlu0 %1097, %v1095
  %v1099 = vpop.permute.xlu0 %1098
  %1101 = vset.pattern.permute.xlu0 7
  %1102 = vperm.xlu0 %1101, %v1095
  %v1103 = vpop.permute.xlu0 %1102
  %v1105 = vsel %vm977, %v1099, %v1103
  %v1106 = vmul.f32 %v1105, %v980
  %v1107 = vadd.f32 %v1106, 0.0
  %1108 = vset.pattern.permute.xlu0 1
  %1109 = vperm.xlu0 %1108, %v1095
  %v1110 = vpop.permute.xlu0 %1109
  %1112 = vset.pattern.permute.xlu0 6
  %1113 = vperm.xlu0 %1112, %v1095
  %v1114 = vpop.permute.xlu0 %1113
  %v1116 = vsel %vm977, %v1110, %v1114
  %v1117 = vmul.f32 %v1116, %v994
  %v1118 = vadd.f32 %v1107, %v1117
  %1119 = vset.pattern.permute.xlu0 2
  %1120 = vperm.xlu0 %1119, %v1095
  %v1121 = vpop.permute.xlu0 %1120
  %1123 = vset.pattern.permute.xlu0 5
  %1124 = vperm.xlu0 %1123, %v1095
  %v1125 = vpop.permute.xlu0 %1124
  %v1127 = vsel %vm977, %v1121, %v1125
  %v1128 = vmul.f32 %v1127, %v1008
  %v1129 = vadd.f32 %v1118, %v1128
  %1130 = vset.pattern.permute.xlu0 3
  %1131 = vperm.xlu0 %1130, %v1095
  %v1132 = vpop.permute.xlu0 %1131
  %1134 = vset.pattern.permute.xlu0 4
  %1135 = vperm.xlu0 %1134, %v1095
  %v1136 = vpop.permute.xlu0 %1135
  %v1138 = vsel %vm977, %v1132, %v1136
  %v1139 = vmul.f32 %v1138, %v1022
  %v1140 = vadd.f32 %v1129, %v1139
  %v1141 = vsel %vm977, %v1136, %v1132
  %v1142 = vmul.f32 %v1141, %v1024
  %v1143 = vadd.f32 %v1140, %v1142
  %v1144 = vsel %vm977, %v1125, %v1121
  %v1145 = vmul.f32 %v1144, %v1010
  %v1146 = vadd.f32 %v1143, %v1145
  %v1147 = vsel %vm977, %v1114, %v1110
  %v1148 = vmul.f32 %v1147, %v996
  %v1149 = vadd.f32 %v1146, %v1148
  %v1150 = vsel %vm977, %v1103, %v1099
  %v1151 = vmul.f32 %v1150, %v982
  %v1152 = vadd.f32 %v1149, %v1151
  %v1153 = vpack.c.bf16 %v966, %v966
  %v1154 = vld [vmem:[%s7] sm:$0xf]
  %v1155 = vld [vmem:[%s7 + $0x4] sm:$0xf]
  %v1156 = vld [vmem:[%s7 + $0x8] sm:$0xf]
  %v1157 = vld [vmem:[%s7 + $0xc] sm:$0xf]
  %v1158 = vld [vmem:[%s7 + $0x10] sm:$0xf]
  %v1159 = vld [vmem:[%s7 + $0x14] sm:$0xf]
  %v1160 = vld [vmem:[%s7 + $0x18] sm:$0xf]
  %v1161 = vld [vmem:[%s7 + $0x1c] sm:$0xf]
  %v1162 = vpack.c.bf16 %v1152, %v1152
  %v1163 = vld [vmem:[%s8] sm:$0xf]
  %v1164 = vld [vmem:[%s8 + $0x4] sm:$0xf]
  %v1165 = vld [vmem:[%s8 + $0x8] sm:$0xf]
  %v1166 = vld [vmem:[%s8 + $0xc] sm:$0xf]
  %v1167 = vld [vmem:[%s8 + $0x10] sm:$0xf]
  %v1168 = vld [vmem:[%s8 + $0x14] sm:$0xf]
  %v1169 = vld [vmem:[%s8 + $0x18] sm:$0xf]
  %v1170 = vld [vmem:[%s8 + $0x1c] sm:$0xf]
  %v1179 = vunpack.c.l.b16 %v1163
  %v1180 = vunpack.c.l.b16 %v1164
  %v1181 = vunpack.c.l.b16 %v1165
  %v1182 = vunpack.c.l.b16 %v1166
  %v1183 = vunpack.c.l.b16 %v1167
  %v1184 = vunpack.c.l.b16 %v1168
  %v1185 = vunpack.c.l.b16 %v1169
  %v1186 = vunpack.c.l.b16 %v1170
  %v1187 = vpack.c.b16 %v1180, %v1179
  %v1188 = vpack.c.b16 %v1182, %v1181
  %v1189 = vpack.c.b16 %v1184, %v1183
  %v1190 = vpack.c.b16 %v1186, %v1185
  %v1196 = vsel %vm105, %v1162, 0
  %1198 = vmatpush.bf16.msra.mxu0 0
  %1199 = vmatpush.bf16.msra.mxu0 0
  %1200 = vmatpush.bf16.msra.mxu0 0
  %1201 = vmatpush.bf16.msra.mxu0 0
  %1202 = vmatpush.bf16.msra.mxu0 %v1190
  %1203 = vmatpush.bf16.msra.mxu0 %v1189
  %1204 = vmatpush.bf16.msra.mxu0 %v1188
  %1205 = vmatpush.bf16.msra.mxu0 %v1187
  %1206 = vmatmul.bf16.gmra.mxu0 %v1196
  %v1207 = vpop.f32.mrf.mxu0
  %v1208 = vadd.f32 0.0, %v1207
  %v1209 = vpop.f32.mrf.mxu0
  %1210 = vdwg.mxu0
  %1212 = vrot.lane.b32.xlu0 %v1153, 64
  %v1213 = vpop.permute.xlu0 %1212
  %v1222 = vunpack.c.l.b16 %v1154
  %v1223 = vunpack.c.l.b16 %v1155
  %v1224 = vunpack.c.l.b16 %v1156
  %v1225 = vunpack.c.l.b16 %v1157
  %v1226 = vunpack.c.l.b16 %v1158
  %v1227 = vunpack.c.l.b16 %v1159
  %v1228 = vunpack.c.l.b16 %v1160
  %v1229 = vunpack.c.l.b16 %v1161
  %v1230 = vpack.c.b16 %v1223, %v1222
  %v1231 = vpack.c.b16 %v1225, %v1224
  %v1232 = vpack.c.b16 %v1227, %v1226
  %v1233 = vpack.c.b16 %v1229, %v1228
  %v1239 = vsel %vm105, %v1213, 0
  %1241 = vmatpush.bf16.msra.mxu0 0
  %1242 = vmatpush.bf16.msra.mxu0 0
  %1243 = vmatpush.bf16.msra.mxu0 0
  %1244 = vmatpush.bf16.msra.mxu0 0
  %1245 = vmatpush.bf16.msra.mxu0 %v1233
  %1246 = vmatpush.bf16.msra.mxu0 %v1232
  %1247 = vmatpush.bf16.msra.mxu0 %v1231
  %1248 = vmatpush.bf16.msra.mxu0 %v1230
  %1249 = vmatmul.bf16.gmra.mxu0 %v1239
  %v1250 = vpop.f32.mrf.mxu0
  %v1251 = vadd.f32 %v1208, %v1250
  %v1252 = vpop.f32.mrf.mxu0
  %1253 = vdwg.mxu0
  %v1254 = vld [vmem:[%s9] sm:$0x1]
  %v1256 = vperm.slane %v1254, 0
  %v1258 = vadd.f32 %v1251, %v1256
  %vm1259 = vcmp.lt.s32.totalorder %v974, 2
  %v1260 = vsel %vm1259, 1, 0
  %vm1261 = vcmp.eq.s32.totalorder %v1260, 1
  %v1262 = vsel %vm1261, %v1258, -1e+30
  %1263 = vmax.xlane.f32.xlu0 %v1262
  %v1264 = vpop.xlane.xlu0 %1263
  %v1265 = vsub.f32 %v1262, %v1264
  %v1266 = vmul.f32 %v1265, 1.442695
  %v1267 = vpow.pop %v1266
  %1268 = vadd.xlane.f32.xlu0 %v1267
  %v1269 = vpop.xlane.xlu0 %1268
  %v1270 = vrcp.pop %v1269
  %v1271 = vmul.f32 %v1267, %v1270
  %1272 = vst [vmem:[%s10] sm:$0xff] %v1258
  %1273 = vst [vmem:[%s11] sm:$0xff] %v1271
  // Predicated region
  $region42: #{aggr_att_rnn_forward.1} parent=0 // pred_check
    _
  $region43: #{aggr_att_rnn_forward.1} parent=0 // pred_check_branch
    %1275 = sbr.rel (0) target = $region45
  $region44: #{aggr_att_rnn_forward.1} parent=0 // pred_region
    _
  $region45: #{aggr_att_rnn_forward.1} parent=0 // pred_fallthru
    _
  // Predicated region
  $region46: #{aggr_att_rnn_forward.1} parent=0 // pred_check
    _
  $region47: #{aggr_att_rnn_forward.1} parent=0 // pred_check_branch
    %1277 = sbr.rel (0) target = $region49
  $region48: #{aggr_att_rnn_forward.1} parent=0 // pred_region
    _
  $region49: #{aggr_att_rnn_forward.1} parent=0 // pred_fallthru
    _
  // Predicated region
  $region50: #{aggr_att_rnn_forward.1} parent=0 // pred_check
    _
  $region51: #{aggr_att_rnn_forward.1} parent=0 // pred_check_branch
    %1279 = sbr.rel (0) target = $region53
  $region52: #{aggr_att_rnn_forward.1} parent=0 // pred_region
    _
  $region53: #{aggr_att_rnn_forward.1} parent=0 // pred_fallthru
    _
  // Predicated region
  $region54: #{aggr_att_rnn_forward.1} parent=0 // pred_check
    _
  $region55: #{aggr_att_rnn_forward.1} parent=0 // pred_check_branch
    %1281 = sbr.rel (0) target = $region57
  $region56: #{aggr_att_rnn_forward.1} parent=0 // pred_region
    _
  $region57: #{aggr_att_rnn_forward.1} parent=0 // pred_fallthru
    _

</llo_original>
